<compile_context>
chip_gen: v7x
topology: tpu7x:2x2x1
jax: 0.10.0
libtpu: 0.0.40
codegen_flags: <defaults>
</compile_context>

<pallas_src>
import functools

import jax
import jax.numpy as jnp
from jax import lax
from jax.experimental import pallas as pl


# ----------------------------- Pallas kernel ------------------------------- #
def _dfn_block_kernel(x_ref, mass_ref, evals_ref, evecs_ref, gx_ref, gy_ref,
                      t_ref, are_ref, aim_ref, w0a_ref, w0b_ref, w0c_ref,
                      b0_ref, w1_ref, b1_ref, o_ref, *, B, V, K):
    x = x_ref[...]            # (B*V, C)  batch folded onto rows
    t = t_ref[...]            # (1, C)    learned diffusion times
    phi = evecs_ref[...]      # (B*V, K)
    ev = evals_ref[...]       # (B*K, 1)
    gx_op = gx_ref[...]       # (B*V, V)
    gy_op = gy_ref[...]       # (B*V, V)

    BV, _ = x.shape
    xm = x * mass_ref[...]    # (B*V, C)

    # --- LearnedTimeDiffusion (spectral) + spatial gradients, statically
    #     unrolled over the small batch (per-sample basis / gradient operators).
    xd_parts, gx_parts, gy_parts = [], [], []
    for b in range(B):
        rows = slice(b * V, (b + 1) * V)          # aligned sublane slab
        phi_b = phi[rows]                          # (V, K)
        ev_b = ev[b * K:(b + 1) * K]               # (K, 1)
        # evecs^T @ (x * mass): contract the vertex axis, no transpose op.
        spec_b = lax.dot_general(phi_b, xm[rows], (((0,), (0,)), ((), ())),
                                 preferred_element_type=jnp.float32)   # (K, C)
        xd_b = jnp.dot(phi_b, jnp.exp(-ev_b * t) * spec_b,
                       preferred_element_type=jnp.float32)             # (V, C)
        gx_parts.append(jnp.dot(gx_op[rows], xd_b,
                                preferred_element_type=jnp.float32))   # (V, C)
        gy_parts.append(jnp.dot(gy_op[rows], xd_b,
                                preferred_element_type=jnp.float32))   # (V, C)
        xd_parts.append(xd_b)

    x_diffuse = jnp.concatenate(xd_parts, axis=0)   # (B*V, C)
    g_x = jnp.concatenate(gx_parts, axis=0)         # (B*V, C)
    g_y = jnp.concatenate(gy_parts, axis=0)         # (B*V, C)

    # --- SpatialGradientFeatures (with gradient rotations) ---
    # Two lane-aligned dots; all splits are sublane-only (row offset B*V).
    gxy = jnp.concatenate([g_x, g_y], axis=0)       # (2*B*V, C)
    r_re = jnp.dot(gxy, are_ref[...], preferred_element_type=jnp.float32)
    r_im = jnp.dot(gxy, aim_ref[...], preferred_element_type=jnp.float32)
    vb_re = r_re[:BV] - r_im[BV:]        # gx @ A_re^T - gy @ A_im^T
    vb_im = r_im[:BV] + r_re[BV:]        # gx @ A_im^T + gy @ A_re^T
    gfeat = jnp.tanh(g_x * vb_re + g_y * vb_im)     # (B*V, C)

    # --- MiniMLP on concat(x, x_diffuse, gfeat): W0^T pre-split into three
    #     slabs, so the lane-axis concat is never materialized.
    h = (jnp.dot(x, w0a_ref[...], preferred_element_type=jnp.float32)
         + jnp.dot(x_diffuse, w0b_ref[...], preferred_element_type=jnp.float32)
         + jnp.dot(gfeat, w0c_ref[...], preferred_element_type=jnp.float32)
         + b0_ref[...])
    h = jnp.maximum(h, 0.0)                          # ReLU
    y = jnp.dot(h, w1_ref[...], preferred_element_type=jnp.float32) + b1_ref[...]

    # --- residual ---
    o_ref[...] = y + x


# ------------------------- one-time parameter prep -------------------------- #
def prepare_params(diff_time, A_re, A_im, W0, b0, W1, b1):
    """Weight glue hoisted out of the per-call jit path (call once)."""
    C = diff_time.shape[0]
    H = W0.shape[0]
    W0T = W0.T                                       # (3C, H)
    return (diff_time.reshape(1, C),                 # t
            A_re.T, A_im.T,                          # (C, C) each
            W0T[:C], W0T[C:2 * C], W0T[2 * C:],      # (C, H) slabs
            b0.reshape(1, H),
            W1.T,                                    # (H, C)
            b1.reshape(1, C))


# ------------------------------- wrapper ------------------------------------ #
@jax.jit
def diffusion_net_block(x_in, mass, evals, evecs, gradX, gradY, params):
    """x_in: (B,V,C), mass: (B,V), evals: (B,K), evecs: (B,V,K),
    gradX/gradY: (B,V,V). `params` from prepare_params()."""
    B, V, C = x_in.shape
    K = evals.shape[-1]

    # metadata-only reshapes (contiguous, no HBM copies): fold batch onto rows
    x2 = x_in.reshape(B * V, C)
    mass2 = mass.reshape(B * V, 1)
    evals2 = evals.reshape(B * K, 1)
    evecs2 = evecs.reshape(B * V, K)
    gX2 = gradX.reshape(B * V, V)
    gY2 = gradY.reshape(B * V, V)

    kernel = functools.partial(_dfn_block_kernel, B=B, V=V, K=K)
    out2 = pl.pallas_call(
        kernel,
        out_shape=jax.ShapeDtypeStruct((B * V, C), x_in.dtype),
    )(x2, mass2, evals2, evecs2, gX2, gY2, *params)
    return out2.reshape(B, V, C)


# ------------------------- pure-JAX reference -------------------------------- #
def _reference(x_in, mass, evals, evecs, gradX, gradY,
               diff_time, A_re, A_im, W0, b0, W1, b1):
    xm = x_in * mass[..., None]
    x_spec = jnp.einsum('bvk,bvc->bkc', evecs, xm)
    coefs = jnp.exp(-evals[..., None] * diff_time[None, None, :])
    x_diff = jnp.einsum('bvk,bkc->bvc', evecs, coefs * x_spec)
    x_gx = jnp.einsum('bvw,bwc->bvc', gradX, x_diff)
    x_gy = jnp.einsum('bvw,bwc->bvc', gradY, x_diff)
    vb_re = x_gx @ A_re.T - x_gy @ A_im.T
    vb_im = x_gy @ A_re.T + x_gx @ A_im.T
    gfeat = jnp.tanh(x_gx * vb_re + x_gy * vb_im)
    feat = jnp.concatenate([x_in, x_diff, gfeat], axis=-1)
    h = jnp.maximum(feat @ W0.T + b0, 0.0)
    y = h @ W1.T + b1
    return y + x_in


# ---------------------------------- main ------------------------------------- #
if __name__ == "__main__":
    B, V, K, C, H = 2, 64, 16, 32, 32   # C_width=32, mlp_hidden_dims=[32]

    key = jax.random.PRNGKey(0)
    ks = jax.random.split(key, 12)

    x_in = jax.random.normal(ks[0], (B, V, C), jnp.float32)
    mass = jax.random.uniform(ks[1], (B, V), jnp.float32, 0.5, 1.5)
    evals = jax.random.uniform(ks[2], (B, K), jnp.float32, 0.0, 2.0)
    evecs = jax.random.normal(ks[3], (B, V, K), jnp.float32) / jnp.sqrt(V)
    gradX = jax.random.normal(ks[4], (B, V, V), jnp.float32) / jnp.sqrt(V)
    gradY = jax.random.normal(ks[5], (B, V, V), jnp.float32) / jnp.sqrt(V)

    # deterministic synthetic parameters (shapes per module __init__)
    diff_time = jax.random.uniform(ks[6], (C,), jnp.float32, 1e-4, 1e-1)
    A_re = jax.random.normal(ks[7], (C, C), jnp.float32) * 0.1
    A_im = jax.random.normal(ks[8], (C, C), jnp.float32) * 0.1
    W0 = jax.random.normal(ks[9], (H, 3 * C), jnp.float32) * 0.1
    b0 = jnp.zeros((H,), jnp.float32)
    W1 = jax.random.normal(ks[10], (C, H), jnp.float32) * 0.1
    b1 = jnp.zeros((C,), jnp.float32)

    params = prepare_params(diff_time, A_re, A_im, W0, b0, W1, b1)

    out = diffusion_net_block(x_in, mass, evals, evecs, gradX, gradY, params)
    out = jax.block_until_ready(out)

    ref = _reference(x_in, mass, evals, evecs, gradX, gradY,
                     diff_time, A_re, A_im, W0, b0, W1, b1)
    assert out.shape == (B, V, C)
    assert jnp.allclose(out, ref, atol=1e-4, rtol=1e-4), "mismatch vs reference"

    print("KERNEL_OK")
</pallas_src>

<mosaic_0001>
module attributes {stable_mosaic.version = 11 : i64} {
  func.func @_dfn_block_kernel(%arg0: memref<128x32xf32, #tpu.memory_space<vmem>>, %arg1: memref<128x1xf32, #tpu.memory_space<vmem>>, %arg2: memref<32x1xf32, #tpu.memory_space<vmem>>, %arg3: memref<128x16xf32, #tpu.memory_space<vmem>>, %arg4: memref<128x64xf32, #tpu.memory_space<vmem>>, %arg5: memref<128x64xf32, #tpu.memory_space<vmem>>, %arg6: memref<1x32xf32, #tpu.memory_space<vmem>>, %arg7: memref<32x32xf32, #tpu.memory_space<vmem>>, %arg8: memref<32x32xf32, #tpu.memory_space<vmem>>, %arg9: memref<32x32xf32, #tpu.memory_space<vmem>>, %arg10: memref<32x32xf32, #tpu.memory_space<vmem>>, %arg11: memref<32x32xf32, #tpu.memory_space<vmem>>, %arg12: memref<1x32xf32, #tpu.memory_space<vmem>>, %arg13: memref<32x32xf32, #tpu.memory_space<vmem>>, %arg14: memref<1x32xf32, #tpu.memory_space<vmem>>, %arg15: memref<128x32xf32, #tpu.memory_space<vmem>>) attributes {dimension_semantics = [], scalar_prefetch = 0 : i64, scratch_operands = 0 : i64, tpu.core_type = #tpu.core_type<tc>} {
    %c0 = arith.constant 0 : index
    %c0_0 = arith.constant 0 : index
    %0 = vector.load %arg0[%c0, %c0_0] : memref<128x32xf32, #tpu.memory_space<vmem>>, vector<128x32xf32>
    %c0_1 = arith.constant 0 : index
    %c0_2 = arith.constant 0 : index
    %1 = vector.load %arg6[%c0_1, %c0_2] : memref<1x32xf32, #tpu.memory_space<vmem>>, vector<1x32xf32>
    %c0_3 = arith.constant 0 : index
    %c0_4 = arith.constant 0 : index
    %2 = vector.load %arg3[%c0_3, %c0_4] : memref<128x16xf32, #tpu.memory_space<vmem>>, vector<128x16xf32>
    %c0_5 = arith.constant 0 : index
    %c0_6 = arith.constant 0 : index
    %3 = vector.load %arg2[%c0_5, %c0_6] : memref<32x1xf32, #tpu.memory_space<vmem>>, vector<32x1xf32>
    %c0_7 = arith.constant 0 : index
    %c0_8 = arith.constant 0 : index
    %4 = vector.load %arg4[%c0_7, %c0_8] : memref<128x64xf32, #tpu.memory_space<vmem>>, vector<128x64xf32>
    %c0_9 = arith.constant 0 : index
    %c0_10 = arith.constant 0 : index
    %5 = vector.load %arg5[%c0_9, %c0_10] : memref<128x64xf32, #tpu.memory_space<vmem>>, vector<128x64xf32>
    %c0_11 = arith.constant 0 : index
    %c0_12 = arith.constant 0 : index
    %6 = vector.load %arg1[%c0_11, %c0_12] : memref<128x1xf32, #tpu.memory_space<vmem>>, vector<128x1xf32>
    %7 = vector.broadcast %6 : vector<128x1xf32> to vector<128x32xf32>
    %8 = arith.mulf %0, %7 : vector<128x32xf32>
    %9 = vector.extract_strided_slice %2 {offsets = [0, 0], sizes = [64, 16], strides = [1, 1]} : vector<128x16xf32> to vector<64x16xf32>
    %10 = vector.extract_strided_slice %3 {offsets = [0, 0], sizes = [16, 1], strides = [1, 1]} : vector<32x1xf32> to vector<16x1xf32>
    %11 = vector.extract_strided_slice %8 {offsets = [0, 0], sizes = [64, 32], strides = [1, 1]} : vector<128x32xf32> to vector<64x32xf32>
    %cst = arith.constant dense<0.000000e+00> : vector<16x32xf32>
    %12 = tpu.matmul %9, %11, %cst {dimension_numbers = #tpu.dot_dimension_numbers<[0], [0], [1], [1], [0, 1, 1, 1], [], []>} : vector<64x16xf32>, vector<64x32xf32>, vector<16x32xf32> -> vector<16x32xf32>
    %cst_13 = arith.constant 0.000000e+00 : f32
    %13 = vector.broadcast %cst_13 : f32 to vector<16x1xf32>
    %14 = arith.subf %13, %10 : vector<16x1xf32>
    %15 = vector.broadcast %14 : vector<16x1xf32> to vector<16x32xf32>
    %16 = vector.broadcast %1 : vector<1x32xf32> to vector<16x32xf32>
    %17 = arith.mulf %15, %16 : vector<16x32xf32>
    %18 = math.exp %17 : vector<16x32xf32>
    %19 = arith.mulf %18, %12 : vector<16x32xf32>
    %cst_14 = arith.constant dense<0.000000e+00> : vector<64x32xf32>
    %20 = tpu.matmul %9, %19, %cst_14 {dimension_numbers = #tpu.dot_dimension_numbers<[1], [0], [0], [1], [0, 0, 1, 1], [], []>} : vector<64x16xf32>, vector<16x32xf32>, vector<64x32xf32> -> vector<64x32xf32>
    %21 = vector.extract_strided_slice %4 {offsets = [0, 0], sizes = [64, 64], strides = [1, 1]} : vector<128x64xf32> to vector<64x64xf32>
    %cst_15 = arith.constant dense<0.000000e+00> : vector<64x32xf32>
    %22 = tpu.matmul %21, %20, %cst_15 {dimension_numbers = #tpu.dot_dimension_numbers<[1], [0], [0], [1], [0, 0, 1, 1], [], []>} : vector<64x64xf32>, vector<64x32xf32>, vector<64x32xf32> -> vector<64x32xf32>
    %23 = vector.extract_strided_slice %5 {offsets = [0, 0], sizes = [64, 64], strides = [1, 1]} : vector<128x64xf32> to vector<64x64xf32>
    %cst_16 = arith.constant dense<0.000000e+00> : vector<64x32xf32>
    %24 = tpu.matmul %23, %20, %cst_16 {dimension_numbers = #tpu.dot_dimension_numbers<[1], [0], [0], [1], [0, 0, 1, 1], [], []>} : vector<64x64xf32>, vector<64x32xf32>, vector<64x32xf32> -> vector<64x32xf32>
    %25 = vector.extract_strided_slice %2 {offsets = [64, 0], sizes = [64, 16], strides = [1, 1]} : vector<128x16xf32> to vector<64x16xf32>
    %26 = vector.extract_strided_slice %3 {offsets = [16, 0], sizes = [16, 1], strides = [1, 1]} : vector<32x1xf32> to vector<16x1xf32>
    %27 = vector.extract_strided_slice %8 {offsets = [64, 0], sizes = [64, 32], strides = [1, 1]} : vector<128x32xf32> to vector<64x32xf32>
    %cst_17 = arith.constant dense<0.000000e+00> : vector<16x32xf32>
    %28 = tpu.matmul %25, %27, %cst_17 {dimension_numbers = #tpu.dot_dimension_numbers<[0], [0], [1], [1], [0, 1, 1, 1], [], []>} : vector<64x16xf32>, vector<64x32xf32>, vector<16x32xf32> -> vector<16x32xf32>
    %cst_18 = arith.constant 0.000000e+00 : f32
    %29 = vector.broadcast %cst_18 : f32 to vector<16x1xf32>
    %30 = arith.subf %29, %26 : vector<16x1xf32>
    %31 = vector.broadcast %30 : vector<16x1xf32> to vector<16x32xf32>
    %32 = vector.broadcast %1 : vector<1x32xf32> to vector<16x32xf32>
    %33 = arith.mulf %31, %32 : vector<16x32xf32>
    %34 = math.exp %33 : vector<16x32xf32>
    %35 = arith.mulf %34, %28 : vector<16x32xf32>
    %cst_19 = arith.constant dense<0.000000e+00> : vector<64x32xf32>
    %36 = tpu.matmul %25, %35, %cst_19 {dimension_numbers = #tpu.dot_dimension_numbers<[1], [0], [0], [1], [0, 0, 1, 1], [], []>} : vector<64x16xf32>, vector<16x32xf32>, vector<64x32xf32> -> vector<64x32xf32>
    %37 = vector.extract_strided_slice %4 {offsets = [64, 0], sizes = [64, 64], strides = [1, 1]} : vector<128x64xf32> to vector<64x64xf32>
    %cst_20 = arith.constant dense<0.000000e+00> : vector<64x32xf32>
    %38 = tpu.matmul %37, %36, %cst_20 {dimension_numbers = #tpu.dot_dimension_numbers<[1], [0], [0], [1], [0, 0, 1, 1], [], []>} : vector<64x64xf32>, vector<64x32xf32>, vector<64x32xf32> -> vector<64x32xf32>
    %39 = vector.extract_strided_slice %5 {offsets = [64, 0], sizes = [64, 64], strides = [1, 1]} : vector<128x64xf32> to vector<64x64xf32>
    %cst_21 = arith.constant dense<0.000000e+00> : vector<64x32xf32>
    %40 = tpu.matmul %39, %36, %cst_21 {dimension_numbers = #tpu.dot_dimension_numbers<[1], [0], [0], [1], [0, 0, 1, 1], [], []>} : vector<64x64xf32>, vector<64x32xf32>, vector<64x32xf32> -> vector<64x32xf32>
    %41 = tpu.concatenate %20, %36 in 0 : vector<64x32xf32>, vector<64x32xf32> -> vector<128x32xf32>
    %42 = tpu.concatenate %22, %38 in 0 : vector<64x32xf32>, vector<64x32xf32> -> vector<128x32xf32>
    %43 = tpu.concatenate %24, %40 in 0 : vector<64x32xf32>, vector<64x32xf32> -> vector<128x32xf32>
    %44 = tpu.concatenate %42, %43 in 0 : vector<128x32xf32>, vector<128x32xf32> -> vector<256x32xf32>
    %c0_22 = arith.constant 0 : index
    %c0_23 = arith.constant 0 : index
    %45 = vector.load %arg7[%c0_22, %c0_23] : memref<32x32xf32, #tpu.memory_space<vmem>>, vector<32x32xf32>
    %cst_24 = arith.constant dense<0.000000e+00> : vector<256x32xf32>
    %46 = tpu.matmul %44, %45, %cst_24 {dimension_numbers = #tpu.dot_dimension_numbers<[1], [0], [0], [1], [0, 0, 1, 1], [], []>} : vector<256x32xf32>, vector<32x32xf32>, vector<256x32xf32> -> vector<256x32xf32>
    %c0_25 = arith.constant 0 : index
    %c0_26 = arith.constant 0 : index
    %47 = vector.load %arg8[%c0_25, %c0_26] : memref<32x32xf32, #tpu.memory_space<vmem>>, vector<32x32xf32>
    %cst_27 = arith.constant dense<0.000000e+00> : vector<256x32xf32>
    %48 = tpu.matmul %44, %47, %cst_27 {dimension_numbers = #tpu.dot_dimension_numbers<[1], [0], [0], [1], [0, 0, 1, 1], [], []>} : vector<256x32xf32>, vector<32x32xf32>, vector<256x32xf32> -> vector<256x32xf32>
    %49 = vector.extract_strided_slice %46 {offsets = [0, 0], sizes = [128, 32], strides = [1, 1]} : vector<256x32xf32> to vector<128x32xf32>
    %50 = vector.extract_strided_slice %48 {offsets = [128, 0], sizes = [128, 32], strides = [1, 1]} : vector<256x32xf32> to vector<128x32xf32>
    %51 = arith.subf %49, %50 : vector<128x32xf32>
    %52 = vector.extract_strided_slice %48 {offsets = [0, 0], sizes = [128, 32], strides = [1, 1]} : vector<256x32xf32> to vector<128x32xf32>
    %53 = vector.extract_strided_slice %46 {offsets = [128, 0], sizes = [128, 32], strides = [1, 1]} : vector<256x32xf32> to vector<128x32xf32>
    %54 = arith.addf %52, %53 : vector<128x32xf32>
    %55 = arith.mulf %42, %51 : vector<128x32xf32>
    %56 = arith.mulf %43, %54 : vector<128x32xf32>
    %57 = arith.addf %55, %56 : vector<128x32xf32>
    %58 = math.tanh %57 : vector<128x32xf32>
    %c0_28 = arith.constant 0 : index
    %c0_29 = arith.constant 0 : index
    %59 = vector.load %arg9[%c0_28, %c0_29] : memref<32x32xf32, #tpu.memory_space<vmem>>, vector<32x32xf32>
    %cst_30 = arith.constant dense<0.000000e+00> : vector<128x32xf32>
    %60 = tpu.matmul %0, %59, %cst_30 {dimension_numbers = #tpu.dot_dimension_numbers<[1], [0], [0], [1], [0, 0, 1, 1], [], []>} : vector<128x32xf32>, vector<32x32xf32>, vector<128x32xf32> -> vector<128x32xf32>
    %c0_31 = arith.constant 0 : index
    %c0_32 = arith.constant 0 : index
    %61 = vector.load %arg10[%c0_31, %c0_32] : memref<32x32xf32, #tpu.memory_space<vmem>>, vector<32x32xf32>
    %cst_33 = arith.constant dense<0.000000e+00> : vector<128x32xf32>
    %62 = tpu.matmul %41, %61, %cst_33 {dimension_numbers = #tpu.dot_dimension_numbers<[1], [0], [0], [1], [0, 0, 1, 1], [], []>} : vector<128x32xf32>, vector<32x32xf32>, vector<128x32xf32> -> vector<128x32xf32>
    %63 = arith.addf %60, %62 : vector<128x32xf32>
    %c0_34 = arith.constant 0 : index
    %c0_35 = arith.constant 0 : index
    %64 = vector.load %arg11[%c0_34, %c0_35] : memref<32x32xf32, #tpu.memory_space<vmem>>, vector<32x32xf32>
    %cst_36 = arith.constant dense<0.000000e+00> : vector<128x32xf32>
    %65 = tpu.matmul %58, %64, %cst_36 {dimension_numbers = #tpu.dot_dimension_numbers<[1], [0], [0], [1], [0, 0, 1, 1], [], []>} : vector<128x32xf32>, vector<32x32xf32>, vector<128x32xf32> -> vector<128x32xf32>
    %66 = arith.addf %63, %65 : vector<128x32xf32>
    %c0_37 = arith.constant 0 : index
    %c0_38 = arith.constant 0 : index
    %67 = vector.load %arg12[%c0_37, %c0_38] : memref<1x32xf32, #tpu.memory_space<vmem>>, vector<1x32xf32>
    %68 = vector.broadcast %67 : vector<1x32xf32> to vector<128x32xf32>
    %69 = arith.addf %66, %68 : vector<128x32xf32>
    %cst_39 = arith.constant 0.000000e+00 : f32
    %70 = vector.broadcast %cst_39 : f32 to vector<128x32xf32>
    %71 = arith.maximumf %69, %70 : vector<128x32xf32>
    %c0_40 = arith.constant 0 : index
    %c0_41 = arith.constant 0 : index
    %72 = vector.load %arg13[%c0_40, %c0_41] : memref<32x32xf32, #tpu.memory_space<vmem>>, vector<32x32xf32>
    %cst_42 = arith.constant dense<0.000000e+00> : vector<128x32xf32>
    %73 = tpu.matmul %71, %72, %cst_42 {dimension_numbers = #tpu.dot_dimension_numbers<[1], [0], [0], [1], [0, 0, 1, 1], [], []>} : vector<128x32xf32>, vector<32x32xf32>, vector<128x32xf32> -> vector<128x32xf32>
    %c0_43 = arith.constant 0 : index
    %c0_44 = arith.constant 0 : index
    %74 = vector.load %arg14[%c0_43, %c0_44] : memref<1x32xf32, #tpu.memory_space<vmem>>, vector<1x32xf32>
    %75 = vector.broadcast %74 : vector<1x32xf32> to vector<128x32xf32>
    %76 = arith.addf %73, %75 : vector<128x32xf32>
    %77 = arith.addf %76, %0 : vector<128x32xf32>
    %c0_45 = arith.constant 0 : index
    %c0_46 = arith.constant 0 : index
    %78 = vector.load %arg15[%c0_45, %c0_46] : memref<128x32xf32, #tpu.memory_space<vmem>>, vector<128x32xf32>
    tpu.vector_store %arg15[%c0_45, %c0_46], %77 {strides = array<i32>} : memref<128x32xf32, #tpu.memory_space<vmem>>, vector<128x32xf32>,
    return
  }
}

</mosaic_0001>

<llo_original>
// kernel: diffusion_net_block.1
$region0: #{diffusion_net_block.1}
  #allocation0 [shape = 'u32[]', space=smem, size = 0x4, offset = 0x4, fixed_abs, tag = 'smem constant byte address 0x4 - core index']
  #allocation1 [shape = 'u32[144,128]{1,0:T(1,128)}', space=vmem, size = 0x12000, scoped, tag = 'internal scratch']
  %s0 = inlined_call_operand.vmem [shape: f32[128,32], index: 0, kind: input, shape index: {}]
  %s1 = inlined_call_operand.vmem [shape: f32[128,1], index: 1, kind: input, shape index: {}]
  %s2 = inlined_call_operand.vmem [shape: f32[32,1], index: 2, kind: input, shape index: {}]
  %s3 = inlined_call_operand.vmem [shape: f32[128,16], index: 3, kind: input, shape index: {}]
  %s4 = inlined_call_operand.vmem [shape: f32[128,64], index: 4, kind: input, shape index: {}]
  %s5 = inlined_call_operand.vmem [shape: f32[128,64], index: 5, kind: input, shape index: {}]
  %s6 = inlined_call_operand.vmem [shape: f32[1,32], index: 6, kind: input, shape index: {}]
  %s7 = inlined_call_operand.vmem [shape: f32[32,32], index: 7, kind: input, shape index: {}]
  %s8 = inlined_call_operand.vmem [shape: f32[32,32], index: 8, kind: input, shape index: {}]
  %s9 = inlined_call_operand.vmem [shape: f32[32,32], index: 9, kind: input, shape index: {}]
  %s10 = inlined_call_operand.vmem [shape: f32[32,32], index: 10, kind: input, shape index: {}]
  %s11 = inlined_call_operand.vmem [shape: f32[32,32], index: 11, kind: input, shape index: {}]
  %s12 = inlined_call_operand.vmem [shape: f32[1,32], index: 12, kind: input, shape index: {}]
  %s13 = inlined_call_operand.vmem [shape: f32[32,32], index: 13, kind: input, shape index: {}]
  %s14 = inlined_call_operand.vmem [shape: f32[1,32], index: 14, kind: input, shape index: {}]
  %s15 = inlined_call_operand.vmem [shape: f32[128,32], index: 15, kind: output, shape index: {}]
  %s16 = sld [smem:[#allocation0]]
  $region70: #{diffusion_net_block.1} parent=0
    _
  %s18 = ssub.s32 1, %s16
  %s19 = scalar_select 0, %s18, %s16
  // Predicated region
  $region2: #{diffusion_net_block.1} parent=0 // pred_check
    _
  $region3: #{diffusion_net_block.1} parent=0 // pred_check_branch
    %21 = sbr.rel (0) target = $region5
  $region4: #{diffusion_net_block.1} parent=0 // pred_region
    _
  $region5: #{diffusion_net_block.1} parent=0 // pred_fallthru
    _
  // Predicated region
  $region6: #{diffusion_net_block.1} parent=0 // pred_check
    _
  $region7: #{diffusion_net_block.1} parent=0 // pred_check_branch
    %23 = sbr.rel (0) target = $region9
  $region8: #{diffusion_net_block.1} parent=0 // pred_region
    _
  $region9: #{diffusion_net_block.1} parent=0 // pred_fallthru
    _
  // Predicated region
  $region10: #{diffusion_net_block.1} parent=0 // pred_check
    _
  $region11: #{diffusion_net_block.1} parent=0 // pred_check_branch
    %25 = sbr.rel (0) target = $region13
  $region12: #{diffusion_net_block.1} parent=0 // pred_region
    _
  $region13: #{diffusion_net_block.1} parent=0 // pred_fallthru
    _
  // Predicated region
  $region14: #{diffusion_net_block.1} parent=0 // pred_check
    _
  $region15: #{diffusion_net_block.1} parent=0 // pred_check_branch
    %27 = sbr.rel (0) target = $region17
  $region16: #{diffusion_net_block.1} parent=0 // pred_region
    _
  $region17: #{diffusion_net_block.1} parent=0 // pred_fallthru
    _
  // Predicated region
  $region18: #{diffusion_net_block.1} parent=0 // pred_check
    _
  $region19: #{diffusion_net_block.1} parent=0 // pred_check_branch
    %29 = sbr.rel (0) target = $region21
  $region20: #{diffusion_net_block.1} parent=0 // pred_region
    _
  $region21: #{diffusion_net_block.1} parent=0 // pred_fallthru
    _
  // Predicated region
  $region22: #{diffusion_net_block.1} parent=0 // pred_check
    _
  $region23: #{diffusion_net_block.1} parent=0 // pred_check_branch
    %31 = sbr.rel (0) target = $region25
  $region24: #{diffusion_net_block.1} parent=0 // pred_region
    _
  $region25: #{diffusion_net_block.1} parent=0 // pred_fallthru
    _
  // Predicated region
  $region26: #{diffusion_net_block.1} parent=0 // pred_check
    _
  $region27: #{diffusion_net_block.1} parent=0 // pred_check_branch
    %33 = sbr.rel (0) target = $region29
  $region28: #{diffusion_net_block.1} parent=0 // pred_region
    _
  $region29: #{diffusion_net_block.1} parent=0 // pred_fallthru
    _
  // Predicated region
  $region30: #{diffusion_net_block.1} parent=0 // pred_check
    _
  $region31: #{diffusion_net_block.1} parent=0 // pred_check_branch
    %35 = sbr.rel (0) target = $region33
  $region32: #{diffusion_net_block.1} parent=0 // pred_region
    _
  $region33: #{diffusion_net_block.1} parent=0 // pred_fallthru
    _
  // Predicated region
  $region34: #{diffusion_net_block.1} parent=0 // pred_check
    _
  $region35: #{diffusion_net_block.1} parent=0 // pred_check_branch
    %37 = sbr.rel (0) target = $region37
  $region36: #{diffusion_net_block.1} parent=0 // pred_region
    _
  $region37: #{diffusion_net_block.1} parent=0 // pred_fallthru
    _
  // Predicated region
  $region38: #{diffusion_net_block.1} parent=0 // pred_check
    _
  $region39: #{diffusion_net_block.1} parent=0 // pred_check_branch
    %39 = sbr.rel (0) target = $region41
  $region40: #{diffusion_net_block.1} parent=0 // pred_region
    _
  $region41: #{diffusion_net_block.1} parent=0 // pred_fallthru
    _
  // Predicated region
  $region42: #{diffusion_net_block.1} parent=0 // pred_check
    _
  $region43: #{diffusion_net_block.1} parent=0 // pred_check_branch
    %41 = sbr.rel (0) target = $region45
  $region44: #{diffusion_net_block.1} parent=0 // pred_region
    _
  $region45: #{diffusion_net_block.1} parent=0 // pred_fallthru
    _
  // Predicated region
  $region46: #{diffusion_net_block.1} parent=0 // pred_check
    _
  $region47: #{diffusion_net_block.1} parent=0 // pred_check_branch
    %43 = sbr.rel (0) target = $region49
  $region48: #{diffusion_net_block.1} parent=0 // pred_region
    _
  $region49: #{diffusion_net_block.1} parent=0 // pred_fallthru
    _
  // Predicated region
  $region50: #{diffusion_net_block.1} parent=0 // pred_check
    _
  $region51: #{diffusion_net_block.1} parent=0 // pred_check_branch
    %45 = sbr.rel (0) target = $region53
  $region52: #{diffusion_net_block.1} parent=0 // pred_region
    _
  $region53: #{diffusion_net_block.1} parent=0 // pred_fallthru
    _
  // Predicated region
  $region54: #{diffusion_net_block.1} parent=0 // pred_check
    _
  $region55: #{diffusion_net_block.1} parent=0 // pred_check_branch
    %47 = sbr.rel (0) target = $region57
  $region56: #{diffusion_net_block.1} parent=0 // pred_region
    _
  $region57: #{diffusion_net_block.1} parent=0 // pred_fallthru
    _
  // Predicated region
  $region58: #{diffusion_net_block.1} parent=0 // pred_check
    _
  $region59: #{diffusion_net_block.1} parent=0 // pred_check_branch
    %49 = sbr.rel (0) target = $region61
  $region60: #{diffusion_net_block.1} parent=0 // pred_region
    _
  $region61: #{diffusion_net_block.1} parent=0 // pred_fallthru
    _
  %v50 = vld [vmem:[%s0] sm:$0xff]
  %v51 = vld [vmem:[%s0 + $0x8] sm:$0xff]
  %v52 = vld [vmem:[%s0 + $0x10] sm:$0xff]
  %v53 = vld [vmem:[%s0 + $0x18] sm:$0xff]
  %v54 = vld [vmem:[%s0 + $0x20] sm:$0xff]
  %v55 = vld [vmem:[%s0 + $0x28] sm:$0xff]
  %v56 = vld [vmem:[%s0 + $0x30] sm:$0xff]
  %v57 = vld [vmem:[%s0 + $0x38] sm:$0xff]
  %v58 = vld [vmem:[%s0 + $0x40] sm:$0xff]
  %v59 = vld [vmem:[%s0 + $0x48] sm:$0xff]
  %v60 = vld [vmem:[%s0 + $0x50] sm:$0xff]
  %v61 = vld [vmem:[%s0 + $0x58] sm:$0xff]
  %v62 = vld [vmem:[%s0 + $0x60] sm:$0xff]
  %v63 = vld [vmem:[%s0 + $0x68] sm:$0xff]
  %v64 = vld [vmem:[%s0 + $0x70] sm:$0xff]
  %v65 = vld [vmem:[%s0 + $0x78] sm:$0xff]
  %v66 = vld [vmem:[%s6] sm:$0x1]
  %v67 = vld [vmem:[%s3] sm:$0xff]
  %v68 = vld [vmem:[%s3 + $0x8] sm:$0xff]
  %v69 = vld [vmem:[%s3 + $0x10] sm:$0xff]
  %v70 = vld [vmem:[%s3 + $0x18] sm:$0xff]
  %v71 = vld [vmem:[%s3 + $0x20] sm:$0xff]
  %v72 = vld [vmem:[%s3 + $0x28] sm:$0xff]
  %v73 = vld [vmem:[%s3 + $0x30] sm:$0xff]
  %v74 = vld [vmem:[%s3 + $0x38] sm:$0xff]
  %v75 = vld [vmem:[%s3 + $0x40] sm:$0xff]
  %v76 = vld [vmem:[%s3 + $0x48] sm:$0xff]
  %v77 = vld [vmem:[%s3 + $0x50] sm:$0xff]
  %v78 = vld [vmem:[%s3 + $0x58] sm:$0xff]
  %v79 = vld [vmem:[%s3 + $0x60] sm:$0xff]
  %v80 = vld [vmem:[%s3 + $0x68] sm:$0xff]
  %v81 = vld [vmem:[%s3 + $0x70] sm:$0xff]
  %v82 = vld [vmem:[%s3 + $0x78] sm:$0xff]
  %v83 = vld [vmem:[%s2] sm:$0xff]
  %v84 = vld [vmem:[%s2 + $0x8] sm:$0xff]
  %v85 = vld [vmem:[%s2 + $0x10] sm:$0xff]
  %v86 = vld [vmem:[%s2 + $0x18] sm:$0xff]
  %v87 = vld [vmem:[%s4] sm:$0xff]
  %v88 = vld [vmem:[%s4 + $0x8] sm:$0xff]
  %v89 = vld [vmem:[%s4 + $0x10] sm:$0xff]
  %v90 = vld [vmem:[%s4 + $0x18] sm:$0xff]
  %v91 = vld [vmem:[%s4 + $0x20] sm:$0xff]
  %v92 = vld [vmem:[%s4 + $0x28] sm:$0xff]
  %v93 = vld [vmem:[%s4 + $0x30] sm:$0xff]
  %v94 = vld [vmem:[%s4 + $0x38] sm:$0xff]
  %v95 = vld [vmem:[%s4 + $0x40] sm:$0xff]
  %v96 = vld [vmem:[%s4 + $0x48] sm:$0xff]
  %v97 = vld [vmem:[%s4 + $0x50] sm:$0xff]
  %v98 = vld [vmem:[%s4 + $0x58] sm:$0xff]
  %v99 = vld [vmem:[%s4 + $0x60] sm:$0xff]
  %v100 = vld [vmem:[%s4 + $0x68] sm:$0xff]
  %v101 = vld [vmem:[%s4 + $0x70] sm:$0xff]
  %v102 = vld [vmem:[%s4 + $0x78] sm:$0xff]
  %v103 = vld [vmem:[%s5] sm:$0xff]
  %v104 = vld [vmem:[%s5 + $0x8] sm:$0xff]
  %v105 = vld [vmem:[%s5 + $0x10] sm:$0xff]
  %v106 = vld [vmem:[%s5 + $0x18] sm:$0xff]
  %v107 = vld [vmem:[%s5 + $0x20] sm:$0xff]
  %v108 = vld [vmem:[%s5 + $0x28] sm:$0xff]
  %v109 = vld [vmem:[%s5 + $0x30] sm:$0xff]
  %v110 = vld [vmem:[%s5 + $0x38] sm:$0xff]
  %v111 = vld [vmem:[%s5 + $0x40] sm:$0xff]
  %v112 = vld [vmem:[%s5 + $0x48] sm:$0xff]
  %v113 = vld [vmem:[%s5 + $0x50] sm:$0xff]
  %v114 = vld [vmem:[%s5 + $0x58] sm:$0xff]
  %v115 = vld [vmem:[%s5 + $0x60] sm:$0xff]
  %v116 = vld [vmem:[%s5 + $0x68] sm:$0xff]
  %v117 = vld [vmem:[%s5 + $0x70] sm:$0xff]
  %v118 = vld [vmem:[%s5 + $0x78] sm:$0xff]
  %v119 = vld [vmem:[%s1] sm:$0xff]
  %v120 = vld [vmem:[%s1 + $0x8] sm:$0xff]
  %v121 = vld [vmem:[%s1 + $0x10] sm:$0xff]
  %v122 = vld [vmem:[%s1 + $0x18] sm:$0xff]
  %v123 = vld [vmem:[%s1 + $0x20] sm:$0xff]
  %v124 = vld [vmem:[%s1 + $0x28] sm:$0xff]
  %v125 = vld [vmem:[%s1 + $0x30] sm:$0xff]
  %v126 = vld [vmem:[%s1 + $0x38] sm:$0xff]
  %v127 = vld [vmem:[%s1 + $0x40] sm:$0xff]
  %v128 = vld [vmem:[%s1 + $0x48] sm:$0xff]
  %v129 = vld [vmem:[%s1 + $0x50] sm:$0xff]
  %v130 = vld [vmem:[%s1 + $0x58] sm:$0xff]
  %v131 = vld [vmem:[%s1 + $0x60] sm:$0xff]
  %v132 = vld [vmem:[%s1 + $0x68] sm:$0xff]
  %v133 = vld [vmem:[%s1 + $0x70] sm:$0xff]
  %v134 = vld [vmem:[%s1 + $0x78] sm:$0xff]
  %136 = vset.pattern.permute.xlu0 0
  %137 = vperm.xlu0 %136, %v119
  %v138 = vpop.permute.xlu0 %137
  %141 = vset.pattern.permute.xlu0 0
  %142 = vperm.xlu0 %141, %v120
  %v143 = vpop.permute.xlu0 %142
  %146 = vset.pattern.permute.xlu0 0
  %147 = vperm.xlu0 %146, %v121
  %v148 = vpop.permute.xlu0 %147
  %151 = vset.pattern.permute.xlu0 0
  %152 = vperm.xlu0 %151, %v122
  %v153 = vpop.permute.xlu0 %152
  %156 = vset.pattern.permute.xlu0 0
  %157 = vperm.xlu0 %156, %v123
  %v158 = vpop.permute.xlu0 %157
  %161 = vset.pattern.permute.xlu0 0
  %162 = vperm.xlu0 %161, %v124
  %v163 = vpop.permute.xlu0 %162
  %166 = vset.pattern.permute.xlu0 0
  %167 = vperm.xlu0 %166, %v125
  %v168 = vpop.permute.xlu0 %167
  %171 = vset.pattern.permute.xlu0 0
  %172 = vperm.xlu0 %171, %v126
  %v173 = vpop.permute.xlu0 %172
  %176 = vset.pattern.permute.xlu0 0
  %177 = vperm.xlu0 %176, %v127
  %v178 = vpop.permute.xlu0 %177
  %181 = vset.pattern.permute.xlu0 0
  %182 = vperm.xlu0 %181, %v128
  %v183 = vpop.permute.xlu0 %182
  %186 = vset.pattern.permute.xlu0 0
  %187 = vperm.xlu0 %186, %v129
  %v188 = vpop.permute.xlu0 %187
  %191 = vset.pattern.permute.xlu0 0
  %192 = vperm.xlu0 %191, %v130
  %v193 = vpop.permute.xlu0 %192
  %196 = vset.pattern.permute.xlu0 0
  %197 = vperm.xlu0 %196, %v131
  %v198 = vpop.permute.xlu0 %197
  %201 = vset.pattern.permute.xlu0 0
  %202 = vperm.xlu0 %201, %v132
  %v203 = vpop.permute.xlu0 %202
  %206 = vset.pattern.permute.xlu0 0
  %207 = vperm.xlu0 %206, %v133
  %v208 = vpop.permute.xlu0 %207
  %211 = vset.pattern.permute.xlu0 0
  %212 = vperm.xlu0 %211, %v134
  %v213 = vpop.permute.xlu0 %212
  %v215 = vmul.f32 %v50, %v138
  %v216 = vmul.f32 %v51, %v143
  %v217 = vmul.f32 %v52, %v148
  %v218 = vmul.f32 %v53, %v153
  %v219 = vmul.f32 %v54, %v158
  %v220 = vmul.f32 %v55, %v163
  %v221 = vmul.f32 %v56, %v168
  %v222 = vmul.f32 %v57, %v173
  %v223 = vmul.f32 %v58, %v178
  %v224 = vmul.f32 %v59, %v183
  %v225 = vmul.f32 %v60, %v188
  %v226 = vmul.f32 %v61, %v193
  %v227 = vmul.f32 %v62, %v198
  %v228 = vmul.f32 %v63, %v203
  %v229 = vmul.f32 %v64, %v208
  %v230 = vmul.f32 %v65, %v213
  %231 = vxpose.xlu0.b32.start [1/16] %v67, 128
  %232 = vxpose.xlu0.b32.cont [2/16] %v68, 128
  %233 = vxpose.xlu0.b32.cont [3/16] %v69, 128
  %234 = vxpose.xlu0.b32.cont [4/16] %v70, 128
  %235 = vxpose.xlu0.b32.cont [5/16] %v71, 128
  %236 = vxpose.xlu0.b32.cont [6/16] %v72, 128
  %237 = vxpose.xlu0.b32.cont [7/16] %v73, 128
  %238 = vxpose.xlu0.b32.cont [8/16] %v74, 128
  %239 = vxpose.xlu0.b32.cont [9/16] 0.0, 128
  %240 = vxpose.xlu0.b32.cont [10/16] 0.0, 128
  %241 = vxpose.xlu0.b32.cont [11/16] 0.0, 128
  %242 = vxpose.xlu0.b32.cont [12/16] 0.0, 128
  %243 = vxpose.xlu0.b32.cont [13/16] 0.0, 128
  %244 = vxpose.xlu0.b32.cont [14/16] 0.0, 128
  %245 = vxpose.xlu0.b32.cont [15/16] 0.0, 128
  %246 = vxpose.xlu0.b32.end [16/16] 0.0, 128
  %v247 = vpop.trf.xlu0
  %v248 = vpop.trf.xlu0
  %v249 = vpop.trf.xlu0
  %v250 = vpop.trf.xlu0
  %v251 = vpop.trf.xlu0
  %v252 = vpop.trf.xlu0
  %v253 = vpop.trf.xlu0
  %v254 = vpop.trf.xlu0
  %v255 = vpop.trf.xlu0
  %v256 = vpop.trf.xlu0
  %v257 = vpop.trf.xlu0
  %v258 = vpop.trf.xlu0
  %v259 = vpop.trf.xlu0
  %v260 = vpop.trf.xlu0
  %v261 = vpop.trf.xlu0
  %v262 = vpop.trf.xlu0
  %vm263 = vcmask 523264
  %v265 = vsel %vm263, %v247, 0
  %v268 = vsel %vm263, %v248, 0
  %270 = vmatprep.subr.mxu0 0.0
  %271 = vmatpush1.msra.mxu0 %v215
  %272 = vmatprep.subr.mxu0 0.0
  %273 = vmatpush1.msra.mxu0 %v216
  %274 = vmatprep.subr.mxu0 0.0
  %275 = vmatpush1.msra.mxu0 %v217
  %276 = vmatprep.subr.mxu0 0.0
  %277 = vmatpush1.msra.mxu0 %v218
  %278 = vmatprep.subr.mxu0 0.0
  %279 = vmatpush1.msra.mxu0 %v219
  %280 = vmatprep.subr.mxu0 0.0
  %281 = vmatpush1.msra.mxu0 %v220
  %282 = vmatprep.subr.mxu0 0.0
  %283 = vmatpush1.msra.mxu0 %v221
  %284 = vmatprep.subr.mxu0 0.0
  %285 = vmatpush1.msra.mxu0 %v222
  %286 = vmatprep.subr.mxu0 0.0
  %287 = vmatpush1.msra.mxu0 0.0
  %288 = vmatprep.subr.mxu0 0.0
  %289 = vmatpush1.msra.mxu0 0.0
  %290 = vmatprep.subr.mxu0 0.0
  %291 = vmatpush1.msra.mxu0 0.0
  %292 = vmatprep.subr.mxu0 0.0
  %293 = vmatpush1.msra.mxu0 0.0
  %294 = vmatprep.subr.mxu0 0.0
  %295 = vmatpush1.msra.mxu0 0.0
  %296 = vmatprep.subr.mxu0 0.0
  %297 = vmatpush1.msra.mxu0 0.0
  %298 = vmatprep.subr.mxu0 0.0
  %299 = vmatpush1.msra.mxu0 0.0
  %300 = vmatprep.subr.mxu0 0.0
  %301 = vmatpush1.msra.mxu0 0.0
  %302 = vmatprep.subr.mxu0 0.0
  %303 = vmatpush1.msra.mxu0 0.0
  %304 = vmatprep.subr.mxu0 0.0
  %305 = vmatpush1.msra.mxu0 0.0
  %306 = vmatprep.subr.mxu0 0.0
  %307 = vmatpush1.msra.mxu0 0.0
  %308 = vmatprep.subr.mxu0 0.0
  %309 = vmatpush1.msra.mxu0 0.0
  %310 = vmatprep.subr.mxu0 0.0
  %311 = vmatpush1.msra.mxu0 0.0
  %312 = vmatprep.subr.mxu0 0.0
  %313 = vmatpush1.msra.mxu0 0.0
  %314 = vmatprep.subr.mxu0 0.0
  %315 = vmatpush1.msra.mxu0 0.0
  %316 = vmatprep.subr.mxu0 0.0
  %317 = vmatpush1.msra.mxu0 0.0
  %318 = vmatprep.subr.mxu0 0.0
  %319 = vmatpush1.msra.mxu0 0.0
  %320 = vmatprep.subr.mxu0 0.0
  %321 = vmatpush1.msra.mxu0 0.0
  %322 = vmatprep.subr.mxu0 0.0
  %323 = vmatpush1.msra.mxu0 0.0
  %324 = vmatprep.subr.mxu0 0.0
  %325 = vmatpush1.msra.mxu0 0.0
  %326 = vmatprep.subr.mxu0 0.0
  %327 = vmatpush1.msra.mxu0 0.0
  %328 = vmatprep.subr.mxu0 0.0
  %329 = vmatpush1.msra.mxu0 0.0
  %330 = vmatprep.subr.mxu0 0.0
  %331 = vmatpush1.msra.mxu0 0.0
  %332 = vmatprep.subr.mxu0 0.0
  %333 = vmatpush1.msra.mxu0 0.0
  %334 = vmatprep.mubr.f32.mxu0 0.0
  %335 = vmatmul.mubr.f32.gmra.mrb[0].mxu0 %v265
  %v336 = vpop.f32.mrb[0].mxu0
  %v337 = vadd.f32 0.0, %v336
  %v338 = vpop.f32.mrb[0].mxu0
  %339 = vmatprep.mubr.f32.mxu0 0.0
  %340 = vmatmul.mubr.f32.gmra.mrb[0].mxu0 %v268
  %v341 = vpop.f32.mrb[0].mxu0
  %v342 = vadd.f32 0.0, %v341
  %v343 = vpop.f32.mrb[0].mxu0
  %344 = vdwg.mxu0
  %v345 = vsub.f32 0.0, %v83
  %v346 = vsub.f32 0.0, %v84
  %348 = vset.pattern.permute.xlu0 0
  %349 = vperm.xlu0 %348, %v345
  %v350 = vpop.permute.xlu0 %349
  %353 = vset.pattern.permute.xlu0 0
  %354 = vperm.xlu0 %353, %v346
  %v355 = vpop.permute.xlu0 %354
  %v358 = vlaneseq
  %v359 = vshrl.u32 %v358, 7
  %v360 = vsub.s32 0, %v359
  %v361 = vrot.slane %v66, %v360
  %v363 = vmul.f32 %v350, %v361
  %v364 = vmul.f32 %v355, %v361
  %v365 = vmul.f32 %v363, 1.442695
  %v366 = vpow.pop %v365
  %v367 = vmul.f32 %v364, 1.442695
  %v368 = vpow.pop %v367
  %v369 = vmul.f32 %v366, %v337
  %v370 = vmul.f32 %v368, %v342
  %vm371 = vcmask 130048
  %v373 = vsel %vm371, %v67, 0
  %v376 = vsel %vm371, %v68, 0
  %v379 = vsel %vm371, %v69, 0
  %v382 = vsel %vm371, %v70, 0
  %v385 = vsel %vm371, %v71, 0
  %v388 = vsel %vm371, %v72, 0
  %v391 = vsel %vm371, %v73, 0
  %v394 = vsel %vm371, %v74, 0
  %396 = vmatprep.subr.mxu0 0.0
  %397 = vmatpush1.msra.mxu0 %v369
  %398 = vmatprep.subr.mxu0 0.0
  %399 = vmatpush1.msra.mxu0 %v370
  %400 = vmatprep.subr.mxu0 0.0
  %401 = vmatpush1.msra.mxu0 0.0
  %402 = vmatprep.subr.mxu0 0.0
  %403 = vmatpush1.msra.mxu0 0.0
  %404 = vmatprep.subr.mxu0 0.0
  %405 = vmatpush1.msra.mxu0 0.0
  %406 = vmatprep.subr.mxu0 0.0
  %407 = vmatpush1.msra.mxu0 0.0
  %408 = vmatprep.subr.mxu0 0.0
  %409 = vmatpush1.msra.mxu0 0.0
  %410 = vmatprep.subr.mxu0 0.0
  %411 = vmatpush1.msra.mxu0 0.0
  %412 = vmatprep.subr.mxu0 0.0
  %413 = vmatpush1.msra.mxu0 0.0
  %414 = vmatprep.subr.mxu0 0.0
  %415 = vmatpush1.msra.mxu0 0.0
  %416 = vmatprep.subr.mxu0 0.0
  %417 = vmatpush1.msra.mxu0 0.0
  %418 = vmatprep.subr.mxu0 0.0
  %419 = vmatpush1.msra.mxu0 0.0
  %420 = vmatprep.subr.mxu0 0.0
  %421 = vmatpush1.msra.mxu0 0.0
  %422 = vmatprep.subr.mxu0 0.0
  %423 = vmatpush1.msra.mxu0 0.0
  %424 = vmatprep.subr.mxu0 0.0
  %425 = vmatpush1.msra.mxu0 0.0
  %426 = vmatprep.subr.mxu0 0.0
  %427 = vmatpush1.msra.mxu0 0.0
  %428 = vmatprep.subr.mxu0 0.0
  %429 = vmatpush1.msra.mxu0 0.0
  %430 = vmatprep.subr.mxu0 0.0
  %431 = vmatpush1.msra.mxu0 0.0
  %432 = vmatprep.subr.mxu0 0.0
  %433 = vmatpush1.msra.mxu0 0.0
  %434 = vmatprep.subr.mxu0 0.0
  %435 = vmatpush1.msra.mxu0 0.0
  %436 = vmatprep.subr.mxu0 0.0
  %437 = vmatpush1.msra.mxu0 0.0
  %438 = vmatprep.subr.mxu0 0.0
  %439 = vmatpush1.msra.mxu0 0.0
  %440 = vmatprep.subr.mxu0 0.0
  %441 = vmatpush1.msra.mxu0 0.0
  %442 = vmatprep.subr.mxu0 0.0
  %443 = vmatpush1.msra.mxu0 0.0
  %444 = vmatprep.subr.mxu0 0.0
  %445 = vmatpush1.msra.mxu0 0.0
  %446 = vmatprep.subr.mxu0 0.0
  %447 = vmatpush1.msra.mxu0 0.0
  %448 = vmatprep.subr.mxu0 0.0
  %449 = vmatpush1.msra.mxu0 0.0
  %450 = vmatprep.subr.mxu0 0.0
  %451 = vmatpush1.msra.mxu0 0.0
  %452 = vmatprep.subr.mxu0 0.0
  %453 = vmatpush1.msra.mxu0 0.0
  %454 = vmatprep.subr.mxu0 0.0
  %455 = vmatpush1.msra.mxu0 0.0
  %456 = vmatprep.subr.mxu0 0.0
  %457 = vmatpush1.msra.mxu0 0.0
  %458 = vmatprep.subr.mxu0 0.0
  %459 = vmatpush1.msra.mxu0 0.0
  %460 = vmatprep.mubr.f32.mxu0 0.0
  %461 = vmatmul.mubr.f32.gmra.mrb[0].mxu0 %v373
  %v462 = vpop.f32.mrb[0].mxu0
  %v463 = vadd.f32 0.0, %v462
  %v464 = vpop.f32.mrb[0].mxu0
  %465 = vmatprep.mubr.f32.mxu0 0.0
  %466 = vmatmul.mubr.f32.gmra.mrb[0].mxu0 %v376
  %v467 = vpop.f32.mrb[0].mxu0
  %v468 = vadd.f32 0.0, %v467
  %v469 = vpop.f32.mrb[0].mxu0
  %470 = vmatprep.mubr.f32.mxu0 0.0
  %471 = vmatmul.mubr.f32.gmra.mrb[0].mxu0 %v379
  %v472 = vpop.f32.mrb[0].mxu0
  %v473 = vadd.f32 0.0, %v472
  %v474 = vpop.f32.mrb[0].mxu0
  %475 = vmatprep.mubr.f32.mxu0 0.0
  %476 = vmatmul.mubr.f32.gmra.mrb[0].mxu0 %v382
  %v477 = vpop.f32.mrb[0].mxu0
  %v478 = vadd.f32 0.0, %v477
  %v479 = vpop.f32.mrb[0].mxu0
  %480 = vmatprep.mubr.f32.mxu0 0.0
  %481 = vmatmul.mubr.f32.gmra.mrb[0].mxu0 %v385
  %v482 = vpop.f32.mrb[0].mxu0
  %v483 = vadd.f32 0.0, %v482
  %v484 = vpop.f32.mrb[0].mxu0
  %485 = vmatprep.mubr.f32.mxu0 0.0
  %486 = vmatmul.mubr.f32.gmra.mrb[0].mxu0 %v388
  %v487 = vpop.f32.mrb[0].mxu0
  %v488 = vadd.f32 0.0, %v487
  %v489 = vpop.f32.mrb[0].mxu0
  %490 = vmatprep.mubr.f32.mxu0 0.0
  %491 = vmatmul.mubr.f32.gmra.mrb[0].mxu0 %v391
  %v492 = vpop.f32.mrb[0].mxu0
  %v493 = vadd.f32 0.0, %v492
  %v494 = vpop.f32.mrb[0].mxu0
  %495 = vmatprep.mubr.f32.mxu0 0.0
  %496 = vmatmul.mubr.f32.gmra.mrb[0].mxu0 %v394
  %v497 = vpop.f32.mrb[0].mxu0
  %v498 = vadd.f32 0.0, %v497
  %v499 = vpop.f32.mrb[0].mxu0
  %500 = vdwg.mxu0
  %v502 = vsel %vm263, %v87, 0
  %v505 = vsel %vm263, %v88, 0
  %v508 = vsel %vm263, %v89, 0
  %v511 = vsel %vm263, %v90, 0
  %v514 = vsel %vm263, %v91, 0
  %v517 = vsel %vm263, %v92, 0
  %v520 = vsel %vm263, %v93, 0
  %v523 = vsel %vm263, %v94, 0
  %525 = vmatprep.subr.mxu0 0.0
  %526 = vmatpush1.msra.mxu0 %v463
  %527 = vmatprep.subr.mxu0 0.0
  %528 = vmatpush1.msra.mxu0 %v468
  %529 = vmatprep.subr.mxu0 0.0
  %530 = vmatpush1.msra.mxu0 %v473
  %531 = vmatprep.subr.mxu0 0.0
  %532 = vmatpush1.msra.mxu0 %v478
  %533 = vmatprep.subr.mxu0 0.0
  %534 = vmatpush1.msra.mxu0 %v483
  %535 = vmatprep.subr.mxu0 0.0
  %536 = vmatpush1.msra.mxu0 %v488
  %537 = vmatprep.subr.mxu0 0.0
  %538 = vmatpush1.msra.mxu0 %v493
  %539 = vmatprep.subr.mxu0 0.0
  %540 = vmatpush1.msra.mxu0 %v498
  %541 = vmatprep.subr.mxu0 0.0
  %542 = vmatpush1.msra.mxu0 0.0
  %543 = vmatprep.subr.mxu0 0.0
  %544 = vmatpush1.msra.mxu0 0.0
  %545 = vmatprep.subr.mxu0 0.0
  %546 = vmatpush1.msra.mxu0 0.0
  %547 = vmatprep.subr.mxu0 0.0
  %548 = vmatpush1.msra.mxu0 0.0
  %549 = vmatprep.subr.mxu0 0.0
  %550 = vmatpush1.msra.mxu0 0.0
  %551 = vmatprep.subr.mxu0 0.0
  %552 = vmatpush1.msra.mxu0 0.0
  %553 = vmatprep.subr.mxu0 0.0
  %554 = vmatpush1.msra.mxu0 0.0
  %555 = vmatprep.subr.mxu0 0.0
  %556 = vmatpush1.msra.mxu0 0.0
  %557 = vmatprep.subr.mxu0 0.0
  %558 = vmatpush1.msra.mxu0 0.0
  %559 = vmatprep.subr.mxu0 0.0
  %560 = vmatpush1.msra.mxu0 0.0
  %561 = vmatprep.subr.mxu0 0.0
  %562 = vmatpush1.msra.mxu0 0.0
  %563 = vmatprep.subr.mxu0 0.0
  %564 = vmatpush1.msra.mxu0 0.0
  %565 = vmatprep.subr.mxu0 0.0
  %566 = vmatpush1.msra.mxu0 0.0
  %567 = vmatprep.subr.mxu0 0.0
  %568 = vmatpush1.msra.mxu0 0.0
  %569 = vmatprep.subr.mxu0 0.0
  %570 = vmatpush1.msra.mxu0 0.0
  %571 = vmatprep.subr.mxu0 0.0
  %572 = vmatpush1.msra.mxu0 0.0
  %573 = vmatprep.subr.mxu0 0.0
  %574 = vmatpush1.msra.mxu0 0.0
  %575 = vmatprep.subr.mxu0 0.0
  %576 = vmatpush1.msra.mxu0 0.0
  %577 = vmatprep.subr.mxu0 0.0
  %578 = vmatpush1.msra.mxu0 0.0
  %579 = vmatprep.subr.mxu0 0.0
  %580 = vmatpush1.msra.mxu0 0.0
  %581 = vmatprep.subr.mxu0 0.0
  %582 = vmatpush1.msra.mxu0 0.0
  %583 = vmatprep.subr.mxu0 0.0
  %584 = vmatpush1.msra.mxu0 0.0
  %585 = vmatprep.subr.mxu0 0.0
  %586 = vmatpush1.msra.mxu0 0.0
  %587 = vmatprep.subr.mxu0 0.0
  %588 = vmatpush1.msra.mxu0 0.0
  %589 = vmatprep.mubr.f32.mxu0 0.0
  %590 = vmatmul.mubr.f32.gmra.mrb[0].mxu0 %v502
  %v591 = vpop.f32.mrb[0].mxu0
  %v592 = vadd.f32 0.0, %v591
  %v593 = vpop.f32.mrb[0].mxu0
  %594 = vmatprep.mubr.f32.mxu0 0.0
  %595 = vmatmul.mubr.f32.gmra.mrb[0].mxu0 %v505
  %v596 = vpop.f32.mrb[0].mxu0
  %v597 = vadd.f32 0.0, %v596
  %v598 = vpop.f32.mrb[0].mxu0
  %599 = vmatprep.mubr.f32.mxu0 0.0
  %600 = vmatmul.mubr.f32.gmra.mrb[0].mxu0 %v508
  %v601 = vpop.f32.mrb[0].mxu0
  %v602 = vadd.f32 0.0, %v601
  %v603 = vpop.f32.mrb[0].mxu0
  %604 = vmatprep.mubr.f32.mxu0 0.0
  %605 = vmatmul.mubr.f32.gmra.mrb[0].mxu0 %v511
  %v606 = vpop.f32.mrb[0].mxu0
  %v607 = vadd.f32 0.0, %v606
  %v608 = vpop.f32.mrb[0].mxu0
  %609 = vmatprep.mubr.f32.mxu0 0.0
  %610 = vmatmul.mubr.f32.gmra.mrb[0].mxu0 %v514
  %v611 = vpop.f32.mrb[0].mxu0
  %v612 = vadd.f32 0.0, %v611
  %v613 = vpop.f32.mrb[0].mxu0
  %614 = vmatprep.mubr.f32.mxu0 0.0
  %615 = vmatmul.mubr.f32.gmra.mrb[0].mxu0 %v517
  %v616 = vpop.f32.mrb[0].mxu0
  %v617 = vadd.f32 0.0, %v616
  %v618 = vpop.f32.mrb[0].mxu0
  %619 = vmatprep.mubr.f32.mxu0 0.0
  %620 = vmatmul.mubr.f32.gmra.mrb[0].mxu0 %v520
  %v621 = vpop.f32.mrb[0].mxu0
  %v622 = vadd.f32 0.0, %v621
  %v623 = vpop.f32.mrb[0].mxu0
  %624 = vmatprep.mubr.f32.mxu0 0.0
  %625 = vmatmul.mubr.f32.gmra.mrb[0].mxu0 %v523
  %v626 = vpop.f32.mrb[0].mxu0
  %v627 = vadd.f32 0.0, %v626
  %v628 = vpop.f32.mrb[0].mxu0
  %629 = vdwg.mxu0
  %v631 = vsel %vm263, %v103, 0
  %v634 = vsel %vm263, %v104, 0
  %v637 = vsel %vm263, %v105, 0
  %v640 = vsel %vm263, %v106, 0
  %v643 = vsel %vm263, %v107, 0
  %v646 = vsel %vm263, %v108, 0
  %v649 = vsel %vm263, %v109, 0
  %v652 = vsel %vm263, %v110, 0
  %654 = vmatprep.subr.mxu0 0.0
  %655 = vmatpush1.msra.mxu0 %v463
  %656 = vmatprep.subr.mxu0 0.0
  %657 = vmatpush1.msra.mxu0 %v468
  %658 = vmatprep.subr.mxu0 0.0
  %659 = vmatpush1.msra.mxu0 %v473
  %660 = vmatprep.subr.mxu0 0.0
  %661 = vmatpush1.msra.mxu0 %v478
  %662 = vmatprep.subr.mxu0 0.0
  %663 = vmatpush1.msra.mxu0 %v483
  %664 = vmatprep.subr.mxu0 0.0
  %665 = vmatpush1.msra.mxu0 %v488
  %666 = vmatprep.subr.mxu0 0.0
  %667 = vmatpush1.msra.mxu0 %v493
  %668 = vmatprep.subr.mxu0 0.0
  %669 = vmatpush1.msra.mxu0 %v498
  %670 = vmatprep.subr.mxu0 0.0
  %671 = vmatpush1.msra.mxu0 0.0
  %672 = vmatprep.subr.mxu0 0.0
  %673 = vmatpush1.msra.mxu0 0.0
  %674 = vmatprep.subr.mxu0 0.0
  %675 = vmatpush1.msra.mxu0 0.0
  %676 = vmatprep.subr.mxu0 0.0
  %677 = vmatpush1.msra.mxu0 0.0
  %678 = vmatprep.subr.mxu0 0.0
  %679 = vmatpush1.msra.mxu0 0.0
  %680 = vmatprep.subr.mxu0 0.0
  %681 = vmatpush1.msra.mxu0 0.0
  %682 = vmatprep.subr.mxu0 0.0
  %683 = vmatpush1.msra.mxu0 0.0
  %684 = vmatprep.subr.mxu0 0.0
  %685 = vmatpush1.msra.mxu0 0.0
  %686 = vmatprep.subr.mxu0 0.0
  %687 = vmatpush1.msra.mxu0 0.0
  %688 = vmatprep.subr.mxu0 0.0
  %689 = vmatpush1.msra.mxu0 0.0
  %690 = vmatprep.subr.mxu0 0.0
  %691 = vmatpush1.msra.mxu0 0.0
  %692 = vmatprep.subr.mxu0 0.0
  %693 = vmatpush1.msra.mxu0 0.0
  %694 = vmatprep.subr.mxu0 0.0
  %695 = vmatpush1.msra.mxu0 0.0
  %696 = vmatprep.subr.mxu0 0.0
  %697 = vmatpush1.msra.mxu0 0.0
  %698 = vmatprep.subr.mxu0 0.0
  %699 = vmatpush1.msra.mxu0 0.0
  %700 = vmatprep.subr.mxu0 0.0
  %701 = vmatpush1.msra.mxu0 0.0
  %702 = vmatprep.subr.mxu0 0.0
  %703 = vmatpush1.msra.mxu0 0.0
  %704 = vmatprep.subr.mxu0 0.0
  %705 = vmatpush1.msra.mxu0 0.0
  %706 = vmatprep.subr.mxu0 0.0
  %707 = vmatpush1.msra.mxu0 0.0
  %708 = vmatprep.subr.mxu0 0.0
  %709 = vmatpush1.msra.mxu0 0.0
  %710 = vmatprep.subr.mxu0 0.0
  %711 = vmatpush1.msra.mxu0 0.0
  %712 = vmatprep.subr.mxu0 0.0
  %713 = vmatpush1.msra.mxu0 0.0
  %714 = vmatprep.subr.mxu0 0.0
  %715 = vmatpush1.msra.mxu0 0.0
  %716 = vmatprep.subr.mxu0 0.0
  %717 = vmatpush1.msra.mxu0 0.0
  %718 = vmatprep.mubr.f32.mxu0 0.0
  %719 = vmatmul.mubr.f32.gmra.mrb[0].mxu0 %v631
  %v720 = vpop.f32.mrb[0].mxu0
  %v721 = vadd.f32 0.0, %v720
  %v722 = vpop.f32.mrb[0].mxu0
  %723 = vmatprep.mubr.f32.mxu0 0.0
  %724 = vmatmul.mubr.f32.gmra.mrb[0].mxu0 %v634
  %v725 = vpop.f32.mrb[0].mxu0
  %v726 = vadd.f32 0.0, %v725
  %v727 = vpop.f32.mrb[0].mxu0
  %728 = vmatprep.mubr.f32.mxu0 0.0
  %729 = vmatmul.mubr.f32.gmra.mrb[0].mxu0 %v637
  %v730 = vpop.f32.mrb[0].mxu0
  %v731 = vadd.f32 0.0, %v730
  %v732 = vpop.f32.mrb[0].mxu0
  %733 = vmatprep.mubr.f32.mxu0 0.0
  %734 = vmatmul.mubr.f32.gmra.mrb[0].mxu0 %v640
  %v735 = vpop.f32.mrb[0].mxu0
  %v736 = vadd.f32 0.0, %v735
  %v737 = vpop.f32.mrb[0].mxu0
  %738 = vmatprep.mubr.f32.mxu0 0.0
  %739 = vmatmul.mubr.f32.gmra.mrb[0].mxu0 %v643
  %v740 = vpop.f32.mrb[0].mxu0
  %v741 = vadd.f32 0.0, %v740
  %v742 = vpop.f32.mrb[0].mxu0
  %743 = vmatprep.mubr.f32.mxu0 0.0
  %744 = vmatmul.mubr.f32.gmra.mrb[0].mxu0 %v646
  %v745 = vpop.f32.mrb[0].mxu0
  %v746 = vadd.f32 0.0, %v745
  %v747 = vpop.f32.mrb[0].mxu0
  %748 = vmatprep.mubr.f32.mxu0 0.0
  %749 = vmatmul.mubr.f32.gmra.mrb[0].mxu0 %v649
  %v750 = vpop.f32.mrb[0].mxu0
  %v751 = vadd.f32 0.0, %v750
  %v752 = vpop.f32.mrb[0].mxu0
  %753 = vmatprep.mubr.f32.mxu0 0.0
  %754 = vmatmul.mubr.f32.gmra.mrb[0].mxu0 %v652
  %v755 = vpop.f32.mrb[0].mxu0
  %v756 = vadd.f32 0.0, %v755
  %v757 = vpop.f32.mrb[0].mxu0
  %758 = vdwg.mxu0
  %759 = vxpose.xlu0.b32.start [1/16] %v75, 128
  %760 = vxpose.xlu0.b32.cont [2/16] %v76, 128
  %761 = vxpose.xlu0.b32.cont [3/16] %v77, 128
  %762 = vxpose.xlu0.b32.cont [4/16] %v78, 128
  %763 = vxpose.xlu0.b32.cont [5/16] %v79, 128
  %764 = vxpose.xlu0.b32.cont [6/16] %v80, 128
  %765 = vxpose.xlu0.b32.cont [7/16] %v81, 128
  %766 = vxpose.xlu0.b32.cont [8/16] %v82, 128
  %767 = vxpose.xlu0.b32.cont [9/16] 0.0, 128
  %768 = vxpose.xlu0.b32.cont [10/16] 0.0, 128
  %769 = vxpose.xlu0.b32.cont [11/16] 0.0, 128
  %770 = vxpose.xlu0.b32.cont [12/16] 0.0, 128
  %771 = vxpose.xlu0.b32.cont [13/16] 0.0, 128
  %772 = vxpose.xlu0.b32.cont [14/16] 0.0, 128
  %773 = vxpose.xlu0.b32.cont [15/16] 0.0, 128
  %774 = vxpose.xlu0.b32.end [16/16] 0.0, 128
  %v775 = vpop.trf.xlu0
  %v776 = vpop.trf.xlu0
  %v777 = vpop.trf.xlu0
  %v778 = vpop.trf.xlu0
  %v779 = vpop.trf.xlu0
  %v780 = vpop.trf.xlu0
  %v781 = vpop.trf.xlu0
  %v782 = vpop.trf.xlu0
  %v783 = vpop.trf.xlu0
  %v784 = vpop.trf.xlu0
  %v785 = vpop.trf.xlu0
  %v786 = vpop.trf.xlu0
  %v787 = vpop.trf.xlu0
  %v788 = vpop.trf.xlu0
  %v789 = vpop.trf.xlu0
  %v790 = vpop.trf.xlu0
  %v792 = vsel %vm263, %v775, 0
  %v795 = vsel %vm263, %v776, 0
  %797 = vmatprep.subr.mxu0 0.0
  %798 = vmatpush1.msra.mxu0 %v223
  %799 = vmatprep.subr.mxu0 0.0
  %800 = vmatpush1.msra.mxu0 %v224
  %801 = vmatprep.subr.mxu0 0.0
  %802 = vmatpush1.msra.mxu0 %v225
  %803 = vmatprep.subr.mxu0 0.0
  %804 = vmatpush1.msra.mxu0 %v226
  %805 = vmatprep.subr.mxu0 0.0
  %806 = vmatpush1.msra.mxu0 %v227
  %807 = vmatprep.subr.mxu0 0.0
  %808 = vmatpush1.msra.mxu0 %v228
  %809 = vmatprep.subr.mxu0 0.0
  %810 = vmatpush1.msra.mxu0 %v229
  %811 = vmatprep.subr.mxu0 0.0
  %812 = vmatpush1.msra.mxu0 %v230
  %813 = vmatprep.subr.mxu0 0.0
  %814 = vmatpush1.msra.mxu0 0.0
  %815 = vmatprep.subr.mxu0 0.0
  %816 = vmatpush1.msra.mxu0 0.0
  %817 = vmatprep.subr.mxu0 0.0
  %818 = vmatpush1.msra.mxu0 0.0
  %819 = vmatprep.subr.mxu0 0.0
  %820 = vmatpush1.msra.mxu0 0.0
  %821 = vmatprep.subr.mxu0 0.0
  %822 = vmatpush1.msra.mxu0 0.0
  %823 = vmatprep.subr.mxu0 0.0
  %824 = vmatpush1.msra.mxu0 0.0
  %825 = vmatprep.subr.mxu0 0.0
  %826 = vmatpush1.msra.mxu0 0.0
  %827 = vmatprep.subr.mxu0 0.0
  %828 = vmatpush1.msra.mxu0 0.0
  %829 = vmatprep.subr.mxu0 0.0
  %830 = vmatpush1.msra.mxu0 0.0
  %831 = vmatprep.subr.mxu0 0.0
  %832 = vmatpush1.msra.mxu0 0.0
  %833 = vmatprep.subr.mxu0 0.0
  %834 = vmatpush1.msra.mxu0 0.0
  %835 = vmatprep.subr.mxu0 0.0
  %836 = vmatpush1.msra.mxu0 0.0
  %837 = vmatprep.subr.mxu0 0.0
  %838 = vmatpush1.msra.mxu0 0.0
  %839 = vmatprep.subr.mxu0 0.0
  %840 = vmatpush1.msra.mxu0 0.0
  %841 = vmatprep.subr.mxu0 0.0
  %842 = vmatpush1.msra.mxu0 0.0
  %843 = vmatprep.subr.mxu0 0.0
  %844 = vmatpush1.msra.mxu0 0.0
  %845 = vmatprep.subr.mxu0 0.0
  %846 = vmatpush1.msra.mxu0 0.0
  %847 = vmatprep.subr.mxu0 0.0
  %848 = vmatpush1.msra.mxu0 0.0
  %849 = vmatprep.subr.mxu0 0.0
  %850 = vmatpush1.msra.mxu0 0.0
  %851 = vmatprep.subr.mxu0 0.0
  %852 = vmatpush1.msra.mxu0 0.0
  %853 = vmatprep.subr.mxu0 0.0
  %854 = vmatpush1.msra.mxu0 0.0
  %855 = vmatprep.subr.mxu0 0.0
  %856 = vmatpush1.msra.mxu0 0.0
  %857 = vmatprep.subr.mxu0 0.0
  %858 = vmatpush1.msra.mxu0 0.0
  %859 = vmatprep.subr.mxu0 0.0
  %860 = vmatpush1.msra.mxu0 0.0
  %861 = vmatprep.mubr.f32.mxu0 0.0
  %862 = vmatmul.mubr.f32.gmra.mrb[0].mxu0 %v792
  %v863 = vpop.f32.mrb[0].mxu0
  %v864 = vadd.f32 0.0, %v863
  %v865 = vpop.f32.mrb[0].mxu0
  %866 = vmatprep.mubr.f32.mxu0 0.0
  %867 = vmatmul.mubr.f32.gmra.mrb[0].mxu0 %v795
  %v868 = vpop.f32.mrb[0].mxu0
  %v869 = vadd.f32 0.0, %v868
  %v870 = vpop.f32.mrb[0].mxu0
  %871 = vdwg.mxu0
  %v872 = vsub.f32 0.0, %v85
  %v873 = vsub.f32 0.0, %v86
  %875 = vset.pattern.permute.xlu0 0
  %876 = vperm.xlu0 %875, %v872
  %v877 = vpop.permute.xlu0 %876
  %880 = vset.pattern.permute.xlu0 0
  %881 = vperm.xlu0 %880, %v873
  %v882 = vpop.permute.xlu0 %881
  %v884 = vmul.f32 %v877, %v361
  %v885 = vmul.f32 %v882, %v361
  %v886 = vmul.f32 %v884, 1.442695
  %v887 = vpow.pop %v886
  %v888 = vmul.f32 %v885, 1.442695
  %v889 = vpow.pop %v888
  %v890 = vmul.f32 %v887, %v864
  %v891 = vmul.f32 %v889, %v869
  %v893 = vsel %vm371, %v75, 0
  %v896 = vsel %vm371, %v76, 0
  %v899 = vsel %vm371, %v77, 0
  %v902 = vsel %vm371, %v78, 0
  %v905 = vsel %vm371, %v79, 0
  %v908 = vsel %vm371, %v80, 0
  %v911 = vsel %vm371, %v81, 0
  %v914 = vsel %vm371, %v82, 0
  %916 = vmatprep.subr.mxu0 0.0
  %917 = vmatpush1.msra.mxu0 %v890
  %918 = vmatprep.subr.mxu0 0.0
  %919 = vmatpush1.msra.mxu0 %v891
  %920 = vmatprep.subr.mxu0 0.0
  %921 = vmatpush1.msra.mxu0 0.0
  %922 = vmatprep.subr.mxu0 0.0
  %923 = vmatpush1.msra.mxu0 0.0
  %924 = vmatprep.subr.mxu0 0.0
  %925 = vmatpush1.msra.mxu0 0.0
  %926 = vmatprep.subr.mxu0 0.0
  %927 = vmatpush1.msra.mxu0 0.0
  %928 = vmatprep.subr.mxu0 0.0
  %929 = vmatpush1.msra.mxu0 0.0
  %930 = vmatprep.subr.mxu0 0.0
  %931 = vmatpush1.msra.mxu0 0.0
  %932 = vmatprep.subr.mxu0 0.0
  %933 = vmatpush1.msra.mxu0 0.0
  %934 = vmatprep.subr.mxu0 0.0
  %935 = vmatpush1.msra.mxu0 0.0
  %936 = vmatprep.subr.mxu0 0.0
  %937 = vmatpush1.msra.mxu0 0.0
  %938 = vmatprep.subr.mxu0 0.0
  %939 = vmatpush1.msra.mxu0 0.0
  %940 = vmatprep.subr.mxu0 0.0
  %941 = vmatpush1.msra.mxu0 0.0
  %942 = vmatprep.subr.mxu0 0.0
  %943 = vmatpush1.msra.mxu0 0.0
  %944 = vmatprep.subr.mxu0 0.0
  %945 = vmatpush1.msra.mxu0 0.0
  %946 = vmatprep.subr.mxu0 0.0
  %947 = vmatpush1.msra.mxu0 0.0
  %948 = vmatprep.subr.mxu0 0.0
  %949 = vmatpush1.msra.mxu0 0.0
  %950 = vmatprep.subr.mxu0 0.0
  %951 = vmatpush1.msra.mxu0 0.0
  %952 = vmatprep.subr.mxu0 0.0
  %953 = vmatpush1.msra.mxu0 0.0
  %954 = vmatprep.subr.mxu0 0.0
  %955 = vmatpush1.msra.mxu0 0.0
  %956 = vmatprep.subr.mxu0 0.0
  %957 = vmatpush1.msra.mxu0 0.0
  %958 = vmatprep.subr.mxu0 0.0
  %959 = vmatpush1.msra.mxu0 0.0
  %960 = vmatprep.subr.mxu0 0.0
  %961 = vmatpush1.msra.mxu0 0.0
  %962 = vmatprep.subr.mxu0 0.0
  %963 = vmatpush1.msra.mxu0 0.0
  %964 = vmatprep.subr.mxu0 0.0
  %965 = vmatpush1.msra.mxu0 0.0
  %966 = vmatprep.subr.mxu0 0.0
  %967 = vmatpush1.msra.mxu0 0.0
  %968 = vmatprep.subr.mxu0 0.0
  %969 = vmatpush1.msra.mxu0 0.0
  %970 = vmatprep.subr.mxu0 0.0
  %971 = vmatpush1.msra.mxu0 0.0
  %972 = vmatprep.subr.mxu0 0.0
  %973 = vmatpush1.msra.mxu0 0.0
  %974 = vmatprep.subr.mxu0 0.0
  %975 = vmatpush1.msra.mxu0 0.0
  %976 = vmatprep.subr.mxu0 0.0
  %977 = vmatpush1.msra.mxu0 0.0
  %978 = vmatprep.subr.mxu0 0.0
  %979 = vmatpush1.msra.mxu0 0.0
  %980 = vmatprep.mubr.f32.mxu0 0.0
  %981 = vmatmul.mubr.f32.gmra.mrb[0].mxu0 %v893
  %v982 = vpop.f32.mrb[0].mxu0
  %v983 = vadd.f32 0.0, %v982
  %v984 = vpop.f32.mrb[0].mxu0
  %985 = vmatprep.mubr.f32.mxu0 0.0
  %986 = vmatmul.mubr.f32.gmra.mrb[0].mxu0 %v896
  %v987 = vpop.f32.mrb[0].mxu0
  %v988 = vadd.f32 0.0, %v987
  %v989 = vpop.f32.mrb[0].mxu0
  %990 = vmatprep.mubr.f32.mxu0 0.0
  %991 = vmatmul.mubr.f32.gmra.mrb[0].mxu0 %v899
  %v992 = vpop.f32.mrb[0].mxu0
  %v993 = vadd.f32 0.0, %v992
  %v994 = vpop.f32.mrb[0].mxu0
  %995 = vmatprep.mubr.f32.mxu0 0.0
  %996 = vmatmul.mubr.f32.gmra.mrb[0].mxu0 %v902
  %v997 = vpop.f32.mrb[0].mxu0
  %v998 = vadd.f32 0.0, %v997
  %v999 = vpop.f32.mrb[0].mxu0
  %1000 = vmatprep.mubr.f32.mxu0 0.0
  %1001 = vmatmul.mubr.f32.gmra.mrb[0].mxu0 %v905
  %v1002 = vpop.f32.mrb[0].mxu0
  %v1003 = vadd.f32 0.0, %v1002
  %v1004 = vpop.f32.mrb[0].mxu0
  %1005 = vmatprep.mubr.f32.mxu0 0.0
  %1006 = vmatmul.mubr.f32.gmra.mrb[0].mxu0 %v908
  %v1007 = vpop.f32.mrb[0].mxu0
  %v1008 = vadd.f32 0.0, %v1007
  %v1009 = vpop.f32.mrb[0].mxu0
  %1010 = vmatprep.mubr.f32.mxu0 0.0
  %1011 = vmatmul.mubr.f32.gmra.mrb[0].mxu0 %v911
  %v1012 = vpop.f32.mrb[0].mxu0
  %v1013 = vadd.f32 0.0, %v1012
  %v1014 = vpop.f32.mrb[0].mxu0
  %1015 = vmatprep.mubr.f32.mxu0 0.0
  %1016 = vmatmul.mubr.f32.gmra.mrb[0].mxu0 %v914
  %v1017 = vpop.f32.mrb[0].mxu0
  %v1018 = vadd.f32 0.0, %v1017
  %v1019 = vpop.f32.mrb[0].mxu0
  %1020 = vdwg.mxu0
  %v1022 = vsel %vm263, %v95, 0
  %v1025 = vsel %vm263, %v96, 0
  %v1028 = vsel %vm263, %v97, 0
  %v1031 = vsel %vm263, %v98, 0
  %v1034 = vsel %vm263, %v99, 0
  %v1037 = vsel %vm263, %v100, 0
  %v1040 = vsel %vm263, %v101, 0
  %v1043 = vsel %vm263, %v102, 0
  %1045 = vmatprep.subr.mxu0 0.0
  %1046 = vmatpush1.msra.mxu0 %v983
  %1047 = vmatprep.subr.mxu0 0.0
  %1048 = vmatpush1.msra.mxu0 %v988
  %1049 = vmatprep.subr.mxu0 0.0
  %1050 = vmatpush1.msra.mxu0 %v993
  %1051 = vmatprep.subr.mxu0 0.0
  %1052 = vmatpush1.msra.mxu0 %v998
  %1053 = vmatprep.subr.mxu0 0.0
  %1054 = vmatpush1.msra.mxu0 %v1003
  %1055 = vmatprep.subr.mxu0 0.0
  %1056 = vmatpush1.msra.mxu0 %v1008
  %1057 = vmatprep.subr.mxu0 0.0
  %1058 = vmatpush1.msra.mxu0 %v1013
  %1059 = vmatprep.subr.mxu0 0.0
  %1060 = vmatpush1.msra.mxu0 %v1018
  %1061 = vmatprep.subr.mxu0 0.0
  %1062 = vmatpush1.msra.mxu0 0.0
  %1063 = vmatprep.subr.mxu0 0.0
  %1064 = vmatpush1.msra.mxu0 0.0
  %1065 = vmatprep.subr.mxu0 0.0
  %1066 = vmatpush1.msra.mxu0 0.0
  %1067 = vmatprep.subr.mxu0 0.0
  %1068 = vmatpush1.msra.mxu0 0.0
  %1069 = vmatprep.subr.mxu0 0.0
  %1070 = vmatpush1.msra.mxu0 0.0
  %1071 = vmatprep.subr.mxu0 0.0
  %1072 = vmatpush1.msra.mxu0 0.0
  %1073 = vmatprep.subr.mxu0 0.0
  %1074 = vmatpush1.msra.mxu0 0.0
  %1075 = vmatprep.subr.mxu0 0.0
  %1076 = vmatpush1.msra.mxu0 0.0
  %1077 = vmatprep.subr.mxu0 0.0
  %1078 = vmatpush1.msra.mxu0 0.0
  %1079 = vmatprep.subr.mxu0 0.0
  %1080 = vmatpush1.msra.mxu0 0.0
  %1081 = vmatprep.subr.mxu0 0.0
  %1082 = vmatpush1.msra.mxu0 0.0
  %1083 = vmatprep.subr.mxu0 0.0
  %1084 = vmatpush1.msra.mxu0 0.0
  %1085 = vmatprep.subr.mxu0 0.0
  %1086 = vmatpush1.msra.mxu0 0.0
  %1087 = vmatprep.subr.mxu0 0.0
  %1088 = vmatpush1.msra.mxu0 0.0
  %1089 = vmatprep.subr.mxu0 0.0
  %1090 = vmatpush1.msra.mxu0 0.0
  %1091 = vmatprep.subr.mxu0 0.0
  %1092 = vmatpush1.msra.mxu0 0.0
  %1093 = vmatprep.subr.mxu0 0.0
  %1094 = vmatpush1.msra.mxu0 0.0
  %1095 = vmatprep.subr.mxu0 0.0
  %1096 = vmatpush1.msra.mxu0 0.0
  %1097 = vmatprep.subr.mxu0 0.0
  %1098 = vmatpush1.msra.mxu0 0.0
  %1099 = vmatprep.subr.mxu0 0.0
  %1100 = vmatpush1.msra.mxu0 0.0
  %1101 = vmatprep.subr.mxu0 0.0
  %1102 = vmatpush1.msra.mxu0 0.0
  %1103 = vmatprep.subr.mxu0 0.0
  %1104 = vmatpush1.msra.mxu0 0.0
  %1105 = vmatprep.subr.mxu0 0.0
  %1106 = vmatpush1.msra.mxu0 0.0
  %1107 = vmatprep.subr.mxu0 0.0
  %1108 = vmatpush1.msra.mxu0 0.0
  %1109 = vmatprep.mubr.f32.mxu0 0.0
  %1110 = vmatmul.mubr.f32.gmra.mrb[0].mxu0 %v1022
  %v1111 = vpop.f32.mrb[0].mxu0
  %v1112 = vadd.f32 0.0, %v1111
  %v1113 = vpop.f32.mrb[0].mxu0
  %1114 = vmatprep.mubr.f32.mxu0 0.0
  %1115 = vmatmul.mubr.f32.gmra.mrb[0].mxu0 %v1025
  %v1116 = vpop.f32.mrb[0].mxu0
  %v1117 = vadd.f32 0.0, %v1116
  %v1118 = vpop.f32.mrb[0].mxu0
  %1119 = vmatprep.mubr.f32.mxu0 0.0
  %1120 = vmatmul.mubr.f32.gmra.mrb[0].mxu0 %v1028
  %v1121 = vpop.f32.mrb[0].mxu0
  %v1122 = vadd.f32 0.0, %v1121
  %v1123 = vpop.f32.mrb[0].mxu0
  %1124 = vmatprep.mubr.f32.mxu0 0.0
  %1125 = vmatmul.mubr.f32.gmra.mrb[0].mxu0 %v1031
  %v1126 = vpop.f32.mrb[0].mxu0
  %v1127 = vadd.f32 0.0, %v1126
  %v1128 = vpop.f32.mrb[0].mxu0
  %1129 = vmatprep.mubr.f32.mxu0 0.0
  %1130 = vmatmul.mubr.f32.gmra.mrb[0].mxu0 %v1034
  %v1131 = vpop.f32.mrb[0].mxu0
  %v1132 = vadd.f32 0.0, %v1131
  %v1133 = vpop.f32.mrb[0].mxu0
  %1134 = vmatprep.mubr.f32.mxu0 0.0
  %1135 = vmatmul.mubr.f32.gmra.mrb[0].mxu0 %v1037
  %v1136 = vpop.f32.mrb[0].mxu0
  %v1137 = vadd.f32 0.0, %v1136
  %v1138 = vpop.f32.mrb[0].mxu0
  %1139 = vmatprep.mubr.f32.mxu0 0.0
  %1140 = vmatmul.mubr.f32.gmra.mrb[0].mxu0 %v1040
  %v1141 = vpop.f32.mrb[0].mxu0
  %v1142 = vadd.f32 0.0, %v1141
  %v1143 = vpop.f32.mrb[0].mxu0
  %1144 = vmatprep.mubr.f32.mxu0 0.0
  %1145 = vmatmul.mubr.f32.gmra.mrb[0].mxu0 %v1043
  %v1146 = vpop.f32.mrb[0].mxu0
  %v1147 = vadd.f32 0.0, %v1146
  %v1148 = vpop.f32.mrb[0].mxu0
  %1149 = vdwg.mxu0
  %v1151 = vsel %vm263, %v111, 0
  %v1154 = vsel %vm263, %v112, 0
  %v1157 = vsel %vm263, %v113, 0
  %v1160 = vsel %vm263, %v114, 0
  %v1163 = vsel %vm263, %v115, 0
  %v1166 = vsel %vm263, %v116, 0
  %v1169 = vsel %vm263, %v117, 0
  %v1172 = vsel %vm263, %v118, 0
  %1174 = vmatprep.subr.mxu0 0.0
  %1175 = vmatpush1.msra.mxu0 %v983
  %1176 = vmatprep.subr.mxu0 0.0
  %1177 = vmatpush1.msra.mxu0 %v988
  %1178 = vmatprep.subr.mxu0 0.0
  %1179 = vmatpush1.msra.mxu0 %v993
  %1180 = vmatprep.subr.mxu0 0.0
  %1181 = vmatpush1.msra.mxu0 %v998
  %1182 = vmatprep.subr.mxu0 0.0
  %1183 = vmatpush1.msra.mxu0 %v1003
  %1184 = vmatprep.subr.mxu0 0.0
  %1185 = vmatpush1.msra.mxu0 %v1008
  %1186 = vmatprep.subr.mxu0 0.0
  %1187 = vmatpush1.msra.mxu0 %v1013
  %1188 = vmatprep.subr.mxu0 0.0
  %1189 = vmatpush1.msra.mxu0 %v1018
  %1190 = vmatprep.subr.mxu0 0.0
  %1191 = vmatpush1.msra.mxu0 0.0
  %1192 = vmatprep.subr.mxu0 0.0
  %1193 = vmatpush1.msra.mxu0 0.0
  %1194 = vmatprep.subr.mxu0 0.0
  %1195 = vmatpush1.msra.mxu0 0.0
  %1196 = vmatprep.subr.mxu0 0.0
  %1197 = vmatpush1.msra.mxu0 0.0
  %1198 = vmatprep.subr.mxu0 0.0
  %1199 = vmatpush1.msra.mxu0 0.0
  %1200 = vmatprep.subr.mxu0 0.0
  %1201 = vmatpush1.msra.mxu0 0.0
  %1202 = vmatprep.subr.mxu0 0.0
  %1203 = vmatpush1.msra.mxu0 0.0
  %1204 = vmatprep.subr.mxu0 0.0
  %1205 = vmatpush1.msra.mxu0 0.0
  %1206 = vmatprep.subr.mxu0 0.0
  %1207 = vmatpush1.msra.mxu0 0.0
  %1208 = vmatprep.subr.mxu0 0.0
  %1209 = vmatpush1.msra.mxu0 0.0
  %1210 = vmatprep.subr.mxu0 0.0
  %1211 = vmatpush1.msra.mxu0 0.0
  %1212 = vmatprep.subr.mxu0 0.0
  %1213 = vmatpush1.msra.mxu0 0.0
  %1214 = vmatprep.subr.mxu0 0.0
  %1215 = vmatpush1.msra.mxu0 0.0
  %1216 = vmatprep.subr.mxu0 0.0
  %1217 = vmatpush1.msra.mxu0 0.0
  %1218 = vmatprep.subr.mxu0 0.0
  %1219 = vmatpush1.msra.mxu0 0.0
  %1220 = vmatprep.subr.mxu0 0.0
  %1221 = vmatpush1.msra.mxu0 0.0
  %1222 = vmatprep.subr.mxu0 0.0
  %1223 = vmatpush1.msra.mxu0 0.0
  %1224 = vmatprep.subr.mxu0 0.0
  %1225 = vmatpush1.msra.mxu0 0.0
  %1226 = vmatprep.subr.mxu0 0.0
  %1227 = vmatpush1.msra.mxu0 0.0
  %1228 = vmatprep.subr.mxu0 0.0
  %1229 = vmatpush1.msra.mxu0 0.0
  %1230 = vmatprep.subr.mxu0 0.0
  %1231 = vmatpush1.msra.mxu0 0.0
  %1232 = vmatprep.subr.mxu0 0.0
  %1233 = vmatpush1.msra.mxu0 0.0
  %1234 = vmatprep.subr.mxu0 0.0
  %1235 = vmatpush1.msra.mxu0 0.0
  %1236 = vmatprep.subr.mxu0 0.0
  %1237 = vmatpush1.msra.mxu0 0.0
  %1238 = vmatprep.mubr.f32.mxu0 0.0
  %1239 = vmatmul.mubr.f32.gmra.mrb[0].mxu0 %v1151
  %v1240 = vpop.f32.mrb[0].mxu0
  %v1241 = vadd.f32 0.0, %v1240
  %v1242 = vpop.f32.mrb[0].mxu0
  %1243 = vmatprep.mubr.f32.mxu0 0.0
  %1244 = vmatmul.mubr.f32.gmra.mrb[0].mxu0 %v1154
  %v1245 = vpop.f32.mrb[0].mxu0
  %v1246 = vadd.f32 0.0, %v1245
  %v1247 = vpop.f32.mrb[0].mxu0
  %1248 = vmatprep.mubr.f32.mxu0 0.0
  %1249 = vmatmul.mubr.f32.gmra.mrb[0].mxu0 %v1157
  %v1250 = vpop.f32.mrb[0].mxu0
  %v1251 = vadd.f32 0.0, %v1250
  %v1252 = vpop.f32.mrb[0].mxu0
  %1253 = vmatprep.mubr.f32.mxu0 0.0
  %1254 = vmatmul.mubr.f32.gmra.mrb[0].mxu0 %v1160
  %v1255 = vpop.f32.mrb[0].mxu0
  %v1256 = vadd.f32 0.0, %v1255
  %v1257 = vpop.f32.mrb[0].mxu0
  %1258 = vmatprep.mubr.f32.mxu0 0.0
  %1259 = vmatmul.mubr.f32.gmra.mrb[0].mxu0 %v1163
  %v1260 = vpop.f32.mrb[0].mxu0
  %v1261 = vadd.f32 0.0, %v1260
  %v1262 = vpop.f32.mrb[0].mxu0
  %1263 = vmatprep.mubr.f32.mxu0 0.0
  %1264 = vmatmul.mubr.f32.gmra.mrb[0].mxu0 %v1166
  %v1265 = vpop.f32.mrb[0].mxu0
  %v1266 = vadd.f32 0.0, %v1265
  %v1267 = vpop.f32.mrb[0].mxu0
  %1268 = vmatprep.mubr.f32.mxu0 0.0
  %1269 = vmatmul.mubr.f32.gmra.mrb[0].mxu0 %v1169
  %v1270 = vpop.f32.mrb[0].mxu0
  %v1271 = vadd.f32 0.0, %v1270
  %v1272 = vpop.f32.mrb[0].mxu0
  %1273 = vmatprep.mubr.f32.mxu0 0.0
  %1274 = vmatmul.mubr.f32.gmra.mrb[0].mxu0 %v1172
  %v1275 = vpop.f32.mrb[0].mxu0
  %v1276 = vadd.f32 0.0, %v1275
  %v1277 = vpop.f32.mrb[0].mxu0
  %1278 = vdwg.mxu0
  %v1279 = vld [vmem:[%s7] sm:$0xff]
  %v1280 = vld [vmem:[%s7 + $0x8] sm:$0xff]
  %v1281 = vld [vmem:[%s7 + $0x10] sm:$0xff]
  %v1282 = vld [vmem:[%s7 + $0x18] sm:$0xff]
  %vm1283 = vcmask 261120
  %v1285 = vsel %vm1283, %v592, 0
  %v1288 = vsel %vm1283, %v597, 0
  %v1291 = vsel %vm1283, %v602, 0
  %v1294 = vsel %vm1283, %v607, 0
  %v1297 = vsel %vm1283, %v612, 0
  %v1300 = vsel %vm1283, %v617, 0
  %v1303 = vsel %vm1283, %v622, 0
  %v1306 = vsel %vm1283, %v627, 0
  %v1309 = vsel %vm1283, %v1112, 0
  %v1312 = vsel %vm1283, %v1117, 0
  %v1315 = vsel %vm1283, %v1122, 0
  %v1318 = vsel %vm1283, %v1127, 0
  %v1321 = vsel %vm1283, %v1132, 0
  %v1324 = vsel %vm1283, %v1137, 0
  %v1327 = vsel %vm1283, %v1142, 0
  %v1330 = vsel %vm1283, %v1147, 0
  %v1333 = vsel %vm1283, %v721, 0
  %v1336 = vsel %vm1283, %v726, 0
  %v1339 = vsel %vm1283, %v731, 0
  %v1342 = vsel %vm1283, %v736, 0
  %v1345 = vsel %vm1283, %v741, 0
  %v1348 = vsel %vm1283, %v746, 0
  %v1351 = vsel %vm1283, %v751, 0
  %v1354 = vsel %vm1283, %v756, 0
  %v1357 = vsel %vm1283, %v1241, 0
  %v1360 = vsel %vm1283, %v1246, 0
  %v1363 = vsel %vm1283, %v1251, 0
  %v1366 = vsel %vm1283, %v1256, 0
  %v1369 = vsel %vm1283, %v1261, 0
  %v1372 = vsel %vm1283, %v1266, 0
  %v1375 = vsel %vm1283, %v1271, 0
  %v1378 = vsel %vm1283, %v1276, 0
  %1380 = vmatprep.subr.mxu0 0.0
  %1381 = vmatpush1.msra.mxu0 %v1279
  %1382 = vmatprep.subr.mxu0 0.0
  %1383 = vmatpush1.msra.mxu0 %v1280
  %1384 = vmatprep.subr.mxu0 0.0
  %1385 = vmatpush1.msra.mxu0 %v1281
  %1386 = vmatprep.subr.mxu0 0.0
  %1387 = vmatpush1.msra.mxu0 %v1282
  %1388 = vmatprep.subr.mxu0 0.0
  %1389 = vmatpush1.msra.mxu0 0.0
  %1390 = vmatprep.subr.mxu0 0.0
  %1391 = vmatpush1.msra.mxu0 0.0
  %1392 = vmatprep.subr.mxu0 0.0
  %1393 = vmatpush1.msra.mxu0 0.0
  %1394 = vmatprep.subr.mxu0 0.0
  %1395 = vmatpush1.msra.mxu0 0.0
  %1396 = vmatprep.subr.mxu0 0.0
  %1397 = vmatpush1.msra.mxu0 0.0
  %1398 = vmatprep.subr.mxu0 0.0
  %1399 = vmatpush1.msra.mxu0 0.0
  %1400 = vmatprep.subr.mxu0 0.0
  %1401 = vmatpush1.msra.mxu0 0.0
  %1402 = vmatprep.subr.mxu0 0.0
  %1403 = vmatpush1.msra.mxu0 0.0
  %1404 = vmatprep.subr.mxu0 0.0
  %1405 = vmatpush1.msra.mxu0 0.0
  %1406 = vmatprep.subr.mxu0 0.0
  %1407 = vmatpush1.msra.mxu0 0.0
  %1408 = vmatprep.subr.mxu0 0.0
  %1409 = vmatpush1.msra.mxu0 0.0
  %1410 = vmatprep.subr.mxu0 0.0
  %1411 = vmatpush1.msra.mxu0 0.0
  %1412 = vmatprep.subr.mxu0 0.0
  %1413 = vmatpush1.msra.mxu0 0.0
  %1414 = vmatprep.subr.mxu0 0.0
  %1415 = vmatpush1.msra.mxu0 0.0
  %1416 = vmatprep.subr.mxu0 0.0
  %1417 = vmatpush1.msra.mxu0 0.0
  %1418 = vmatprep.subr.mxu0 0.0
  %1419 = vmatpush1.msra.mxu0 0.0
  %1420 = vmatprep.subr.mxu0 0.0
  %1421 = vmatpush1.msra.mxu0 0.0
  %1422 = vmatprep.subr.mxu0 0.0
  %1423 = vmatpush1.msra.mxu0 0.0
  %1424 = vmatprep.subr.mxu0 0.0
  %1425 = vmatpush1.msra.mxu0 0.0
  %1426 = vmatprep.subr.mxu0 0.0
  %1427 = vmatpush1.msra.mxu0 0.0
  %1428 = vmatprep.subr.mxu0 0.0
  %1429 = vmatpush1.msra.mxu0 0.0
  %1430 = vmatprep.subr.mxu0 0.0
  %1431 = vmatpush1.msra.mxu0 0.0
  %1432 = vmatprep.subr.mxu0 0.0
  %1433 = vmatpush1.msra.mxu0 0.0
  %1434 = vmatprep.subr.mxu0 0.0
  %1435 = vmatpush1.msra.mxu0 0.0
  %1436 = vmatprep.subr.mxu0 0.0
  %1437 = vmatpush1.msra.mxu0 0.0
  %1438 = vmatprep.subr.mxu0 0.0
  %1439 = vmatpush1.msra.mxu0 0.0
  %1440 = vmatprep.subr.mxu0 0.0
  %1441 = vmatpush1.msra.mxu0 0.0
  %1442 = vmatprep.subr.mxu0 0.0
  %1443 = vmatpush1.msra.mxu0 0.0
  %1444 = vmatprep.mubr.f32.mxu0 0.0
  %1445 = vmatmul.mubr.f32.gmra.mrb[0].mxu0 %v1285
  %v1446 = vpop.f32.mrb[0].mxu0
  %v1447 = vadd.f32 0.0, %v1446
  %v1448 = vpop.f32.mrb[0].mxu0
  %1449 = vmatprep.mubr.f32.mxu0 0.0
  %1450 = vmatmul.mubr.f32.gmra.mrb[0].mxu0 %v1288
  %v1451 = vpop.f32.mrb[0].mxu0
  %v1452 = vadd.f32 0.0, %v1451
  %v1453 = vpop.f32.mrb[0].mxu0
  %1454 = vmatprep.mubr.f32.mxu0 0.0
  %1455 = vmatmul.mubr.f32.gmra.mrb[0].mxu0 %v1291
  %v1456 = vpop.f32.mrb[0].mxu0
  %v1457 = vadd.f32 0.0, %v1456
  %v1458 = vpop.f32.mrb[0].mxu0
  %1459 = vmatprep.mubr.f32.mxu0 0.0
  %1460 = vmatmul.mubr.f32.gmra.mrb[0].mxu0 %v1294
  %v1461 = vpop.f32.mrb[0].mxu0
  %v1462 = vadd.f32 0.0, %v1461
  %v1463 = vpop.f32.mrb[0].mxu0
  %1464 = vmatprep.mubr.f32.mxu0 0.0
  %1465 = vmatmul.mubr.f32.gmra.mrb[0].mxu0 %v1297
  %v1466 = vpop.f32.mrb[0].mxu0
  %v1467 = vadd.f32 0.0, %v1466
  %v1468 = vpop.f32.mrb[0].mxu0
  %1469 = vmatprep.mubr.f32.mxu0 0.0
  %1470 = vmatmul.mubr.f32.gmra.mrb[0].mxu0 %v1300
  %v1471 = vpop.f32.mrb[0].mxu0
  %v1472 = vadd.f32 0.0, %v1471
  %v1473 = vpop.f32.mrb[0].mxu0
  %1474 = vmatprep.mubr.f32.mxu0 0.0
  %1475 = vmatmul.mubr.f32.gmra.mrb[0].mxu0 %v1303
  %v1476 = vpop.f32.mrb[0].mxu0
  %v1477 = vadd.f32 0.0, %v1476
  %v1478 = vpop.f32.mrb[0].mxu0
  %1479 = vmatprep.mubr.f32.mxu0 0.0
  %1480 = vmatmul.mubr.f32.gmra.mrb[0].mxu0 %v1306
  %v1481 = vpop.f32.mrb[0].mxu0
  %v1482 = vadd.f32 0.0, %v1481
  %v1483 = vpop.f32.mrb[0].mxu0
  %1484 = vmatprep.mubr.f32.mxu0 0.0
  %1485 = vmatmul.mubr.f32.gmra.mrb[0].mxu0 %v1309
  %v1486 = vpop.f32.mrb[0].mxu0
  %v1487 = vadd.f32 0.0, %v1486
  %v1488 = vpop.f32.mrb[0].mxu0
  %1489 = vmatprep.mubr.f32.mxu0 0.0
  %1490 = vmatmul.mubr.f32.gmra.mrb[0].mxu0 %v1312
  %v1491 = vpop.f32.mrb[0].mxu0
  %v1492 = vadd.f32 0.0, %v1491
  %v1493 = vpop.f32.mrb[0].mxu0
  %1494 = vmatprep.mubr.f32.mxu0 0.0
  %1495 = vmatmul.mubr.f32.gmra.mrb[0].mxu0 %v1315
  %v1496 = vpop.f32.mrb[0].mxu0
  %v1497 = vadd.f32 0.0, %v1496
  %v1498 = vpop.f32.mrb[0].mxu0
  %1499 = vmatprep.mubr.f32.mxu0 0.0
  %1500 = vmatmul.mubr.f32.gmra.mrb[0].mxu0 %v1318
  %v1501 = vpop.f32.mrb[0].mxu0
  %v1502 = vadd.f32 0.0, %v1501
  %v1503 = vpop.f32.mrb[0].mxu0
  %1504 = vmatprep.mubr.f32.mxu0 0.0
  %1505 = vmatmul.mubr.f32.gmra.mrb[0].mxu0 %v1321
  %v1506 = vpop.f32.mrb[0].mxu0
  %v1507 = vadd.f32 0.0, %v1506
  %v1508 = vpop.f32.mrb[0].mxu0
  %1509 = vmatprep.mubr.f32.mxu0 0.0
  %1510 = vmatmul.mubr.f32.gmra.mrb[0].mxu0 %v1324
  %v1511 = vpop.f32.mrb[0].mxu0
  %v1512 = vadd.f32 0.0, %v1511
  %v1513 = vpop.f32.mrb[0].mxu0
  %1514 = vmatprep.mubr.f32.mxu0 0.0
  %1515 = vmatmul.mubr.f32.gmra.mrb[0].mxu0 %v1327
  %v1516 = vpop.f32.mrb[0].mxu0
  %v1517 = vadd.f32 0.0, %v1516
  %v1518 = vpop.f32.mrb[0].mxu0
  %1519 = vmatprep.mubr.f32.mxu0 0.0
  %1520 = vmatmul.mubr.f32.gmra.mrb[0].mxu0 %v1330
  %v1521 = vpop.f32.mrb[0].mxu0
  %v1522 = vadd.f32 0.0, %v1521
  %v1523 = vpop.f32.mrb[0].mxu0
  %1524 = vmatprep.mubr.f32.mxu0 0.0
  %1525 = vmatmul.mubr.f32.gmra.mrb[0].mxu0 %v1333
  %v1526 = vpop.f32.mrb[0].mxu0
  %v1527 = vadd.f32 0.0, %v1526
  %v1528 = vpop.f32.mrb[0].mxu0
  %1529 = vmatprep.mubr.f32.mxu0 0.0
  %1530 = vmatmul.mubr.f32.gmra.mrb[0].mxu0 %v1336
  %v1531 = vpop.f32.mrb[0].mxu0
  %v1532 = vadd.f32 0.0, %v1531
  %v1533 = vpop.f32.mrb[0].mxu0
  %1534 = vmatprep.mubr.f32.mxu0 0.0
  %1535 = vmatmul.mubr.f32.gmra.mrb[0].mxu0 %v1339
  %v1536 = vpop.f32.mrb[0].mxu0
  %v1537 = vadd.f32 0.0, %v1536
  %v1538 = vpop.f32.mrb[0].mxu0
  %1539 = vmatprep.mubr.f32.mxu0 0.0
  %1540 = vmatmul.mubr.f32.gmra.mrb[0].mxu0 %v1342
  %v1541 = vpop.f32.mrb[0].mxu0
  %v1542 = vadd.f32 0.0, %v1541
  %v1543 = vpop.f32.mrb[0].mxu0
  %1544 = vmatprep.mubr.f32.mxu0 0.0
  %1545 = vmatmul.mubr.f32.gmra.mrb[0].mxu0 %v1345
  %v1546 = vpop.f32.mrb[0].mxu0
  %v1547 = vadd.f32 0.0, %v1546
  %v1548 = vpop.f32.mrb[0].mxu0
  %1549 = vmatprep.mubr.f32.mxu0 0.0
  %1550 = vmatmul.mubr.f32.gmra.mrb[0].mxu0 %v1348
  %v1551 = vpop.f32.mrb[0].mxu0
  %v1552 = vadd.f32 0.0, %v1551
  %v1553 = vpop.f32.mrb[0].mxu0
  %1554 = vmatprep.mubr.f32.mxu0 0.0
  %1555 = vmatmul.mubr.f32.gmra.mrb[0].mxu0 %v1351
  %v1556 = vpop.f32.mrb[0].mxu0
  %v1557 = vadd.f32 0.0, %v1556
  %v1558 = vpop.f32.mrb[0].mxu0
  %1559 = vmatprep.mubr.f32.mxu0 0.0
  %1560 = vmatmul.mubr.f32.gmra.mrb[0].mxu0 %v1354
  %v1561 = vpop.f32.mrb[0].mxu0
  %v1562 = vadd.f32 0.0, %v1561
  %v1563 = vpop.f32.mrb[0].mxu0
  %1564 = vmatprep.mubr.f32.mxu0 0.0
  %1565 = vmatmul.mubr.f32.gmra.mrb[0].mxu0 %v1357
  %v1566 = vpop.f32.mrb[0].mxu0
  %v1567 = vadd.f32 0.0, %v1566
  %v1568 = vpop.f32.mrb[0].mxu0
  %1569 = vmatprep.mubr.f32.mxu0 0.0
  %1570 = vmatmul.mubr.f32.gmra.mrb[0].mxu0 %v1360
  %v1571 = vpop.f32.mrb[0].mxu0
  %v1572 = vadd.f32 0.0, %v1571
  %v1573 = vpop.f32.mrb[0].mxu0
  %1574 = vmatprep.mubr.f32.mxu0 0.0
  %1575 = vmatmul.mubr.f32.gmra.mrb[0].mxu0 %v1363
  %v1576 = vpop.f32.mrb[0].mxu0
  %v1577 = vadd.f32 0.0, %v1576
  %v1578 = vpop.f32.mrb[0].mxu0
  %1579 = vmatprep.mubr.f32.mxu0 0.0
  %1580 = vmatmul.mubr.f32.gmra.mrb[0].mxu0 %v1366
  %v1581 = vpop.f32.mrb[0].mxu0
  %v1582 = vadd.f32 0.0, %v1581
  %v1583 = vpop.f32.mrb[0].mxu0
  %1584 = vmatprep.mubr.f32.mxu0 0.0
  %1585 = vmatmul.mubr.f32.gmra.mrb[0].mxu0 %v1369
  %v1586 = vpop.f32.mrb[0].mxu0
  %v1587 = vadd.f32 0.0, %v1586
  %v1588 = vpop.f32.mrb[0].mxu0
  %1589 = vmatprep.mubr.f32.mxu0 0.0
  %1590 = vmatmul.mubr.f32.gmra.mrb[0].mxu0 %v1372
  %v1591 = vpop.f32.mrb[0].mxu0
  %v1592 = vadd.f32 0.0, %v1591
  %v1593 = vpop.f32.mrb[0].mxu0
  %1594 = vmatprep.mubr.f32.mxu0 0.0
  %1595 = vmatmul.mubr.f32.gmra.mrb[0].mxu0 %v1375
  %v1596 = vpop.f32.mrb[0].mxu0
  %v1597 = vadd.f32 0.0, %v1596
  %v1598 = vpop.f32.mrb[0].mxu0
  %1599 = vmatprep.mubr.f32.mxu0 0.0
  %1600 = vmatmul.mubr.f32.gmra.mrb[0].mxu0 %v1378
  %v1601 = vpop.f32.mrb[0].mxu0
  %v1602 = vadd.f32 0.0, %v1601
  %v1603 = vpop.f32.mrb[0].mxu0
  %1604 = vdwg.mxu0
  %v1605 = vld [vmem:[%s8] sm:$0xff]
  %v1606 = vld [vmem:[%s8 + $0x8] sm:$0xff]
  %v1607 = vld [vmem:[%s8 + $0x10] sm:$0xff]
  %v1608 = vld [vmem:[%s8 + $0x18] sm:$0xff]
  %1609 = vmatprep.subr.mxu0 0.0
  %1610 = vmatpush1.msra.mxu0 %v1605
  %1611 = vmatprep.subr.mxu0 0.0
  %1612 = vmatpush1.msra.mxu0 %v1606
  %1613 = vmatprep.subr.mxu0 0.0
  %1614 = vmatpush1.msra.mxu0 %v1607
  %1615 = vmatprep.subr.mxu0 0.0
  %1616 = vmatpush1.msra.mxu0 %v1608
  %1617 = vmatprep.subr.mxu0 0.0
  %1618 = vmatpush1.msra.mxu0 0.0
  %1619 = vmatprep.subr.mxu0 0.0
  %1620 = vmatpush1.msra.mxu0 0.0
  %1621 = vmatprep.subr.mxu0 0.0
  %1622 = vmatpush1.msra.mxu0 0.0
  %1623 = vmatprep.subr.mxu0 0.0
  %1624 = vmatpush1.msra.mxu0 0.0
  %1625 = vmatprep.subr.mxu0 0.0
  %1626 = vmatpush1.msra.mxu0 0.0
  %1627 = vmatprep.subr.mxu0 0.0
  %1628 = vmatpush1.msra.mxu0 0.0
  %1629 = vmatprep.subr.mxu0 0.0
  %1630 = vmatpush1.msra.mxu0 0.0
  %1631 = vmatprep.subr.mxu0 0.0
  %1632 = vmatpush1.msra.mxu0 0.0
  %1633 = vmatprep.subr.mxu0 0.0
  %1634 = vmatpush1.msra.mxu0 0.0
  %1635 = vmatprep.subr.mxu0 0.0
  %1636 = vmatpush1.msra.mxu0 0.0
  %1637 = vmatprep.subr.mxu0 0.0
  %1638 = vmatpush1.msra.mxu0 0.0
  %1639 = vmatprep.subr.mxu0 0.0
  %1640 = vmatpush1.msra.mxu0 0.0
  %1641 = vmatprep.subr.mxu0 0.0
  %1642 = vmatpush1.msra.mxu0 0.0
  %1643 = vmatprep.subr.mxu0 0.0
  %1644 = vmatpush1.msra.mxu0 0.0
  %1645 = vmatprep.subr.mxu0 0.0
  %1646 = vmatpush1.msra.mxu0 0.0
  %1647 = vmatprep.subr.mxu0 0.0
  %1648 = vmatpush1.msra.mxu0 0.0
  %1649 = vmatprep.subr.mxu0 0.0
  %1650 = vmatpush1.msra.mxu0 0.0
  %1651 = vmatprep.subr.mxu0 0.0
  %1652 = vmatpush1.msra.mxu0 0.0
  %1653 = vmatprep.subr.mxu0 0.0
  %1654 = vmatpush1.msra.mxu0 0.0
  %1655 = vmatprep.subr.mxu0 0.0
  %1656 = vmatpush1.msra.mxu0 0.0
  %1657 = vmatprep.subr.mxu0 0.0
  %1658 = vmatpush1.msra.mxu0 0.0
  %1659 = vmatprep.subr.mxu0 0.0
  %1660 = vmatpush1.msra.mxu0 0.0
  %1661 = vmatprep.subr.mxu0 0.0
  %1662 = vmatpush1.msra.mxu0 0.0
  %1663 = vmatprep.subr.mxu0 0.0
  %1664 = vmatpush1.msra.mxu0 0.0
  %1665 = vmatprep.subr.mxu0 0.0
  %1666 = vmatpush1.msra.mxu0 0.0
  %1667 = vmatprep.subr.mxu0 0.0
  %1668 = vmatpush1.msra.mxu0 0.0
  %1669 = vmatprep.subr.mxu0 0.0
  %1670 = vmatpush1.msra.mxu0 0.0
  %1671 = vmatprep.subr.mxu0 0.0
  %1672 = vmatpush1.msra.mxu0 0.0
  %1673 = vmatprep.mubr.f32.mxu0 0.0
  %1674 = vmatmul.mubr.f32.gmra.mrb[0].mxu0 %v1285
  %v1675 = vpop.f32.mrb[0].mxu0
  %v1676 = vadd.f32 0.0, %v1675
  %v1677 = vpop.f32.mrb[0].mxu0
  %1678 = vmatprep.mubr.f32.mxu0 0.0
  %1679 = vmatmul.mubr.f32.gmra.mrb[0].mxu0 %v1288
  %v1680 = vpop.f32.mrb[0].mxu0
  %v1681 = vadd.f32 0.0, %v1680
  %v1682 = vpop.f32.mrb[0].mxu0
  %1683 = vmatprep.mubr.f32.mxu0 0.0
  %1684 = vmatmul.mubr.f32.gmra.mrb[0].mxu0 %v1291
  %v1685 = vpop.f32.mrb[0].mxu0
  %v1686 = vadd.f32 0.0, %v1685
  %v1687 = vpop.f32.mrb[0].mxu0
  %1688 = vmatprep.mubr.f32.mxu0 0.0
  %1689 = vmatmul.mubr.f32.gmra.mrb[0].mxu0 %v1294
  %v1690 = vpop.f32.mrb[0].mxu0
  %v1691 = vadd.f32 0.0, %v1690
  %v1692 = vpop.f32.mrb[0].mxu0
  %1693 = vmatprep.mubr.f32.mxu0 0.0
  %1694 = vmatmul.mubr.f32.gmra.mrb[0].mxu0 %v1297
  %v1695 = vpop.f32.mrb[0].mxu0
  %v1696 = vadd.f32 0.0, %v1695
  %v1697 = vpop.f32.mrb[0].mxu0
  %1698 = vmatprep.mubr.f32.mxu0 0.0
  %1699 = vmatmul.mubr.f32.gmra.mrb[0].mxu0 %v1300
  %v1700 = vpop.f32.mrb[0].mxu0
  %v1701 = vadd.f32 0.0, %v1700
  %v1702 = vpop.f32.mrb[0].mxu0
  %1703 = vmatprep.mubr.f32.mxu0 0.0
  %1704 = vmatmul.mubr.f32.gmra.mrb[0].mxu0 %v1303
  %v1705 = vpop.f32.mrb[0].mxu0
  %v1706 = vadd.f32 0.0, %v1705
  %v1707 = vpop.f32.mrb[0].mxu0
  %1708 = vmatprep.mubr.f32.mxu0 0.0
  %1709 = vmatmul.mubr.f32.gmra.mrb[0].mxu0 %v1306
  %v1710 = vpop.f32.mrb[0].mxu0
  %v1711 = vadd.f32 0.0, %v1710
  %v1712 = vpop.f32.mrb[0].mxu0
  %1713 = vmatprep.mubr.f32.mxu0 0.0
  %1714 = vmatmul.mubr.f32.gmra.mrb[0].mxu0 %v1309
  %v1715 = vpop.f32.mrb[0].mxu0
  %v1716 = vadd.f32 0.0, %v1715
  %v1717 = vpop.f32.mrb[0].mxu0
  %1718 = vmatprep.mubr.f32.mxu0 0.0
  %1719 = vmatmul.mubr.f32.gmra.mrb[0].mxu0 %v1312
  %v1720 = vpop.f32.mrb[0].mxu0
  %v1721 = vadd.f32 0.0, %v1720
  %v1722 = vpop.f32.mrb[0].mxu0
  %1723 = vmatprep.mubr.f32.mxu0 0.0
  %1724 = vmatmul.mubr.f32.gmra.mrb[0].mxu0 %v1315
  %v1725 = vpop.f32.mrb[0].mxu0
  %v1726 = vadd.f32 0.0, %v1725
  %v1727 = vpop.f32.mrb[0].mxu0
  %1728 = vmatprep.mubr.f32.mxu0 0.0
  %1729 = vmatmul.mubr.f32.gmra.mrb[0].mxu0 %v1318
  %v1730 = vpop.f32.mrb[0].mxu0
  %v1731 = vadd.f32 0.0, %v1730
  %v1732 = vpop.f32.mrb[0].mxu0
  %1733 = vmatprep.mubr.f32.mxu0 0.0
  %1734 = vmatmul.mubr.f32.gmra.mrb[0].mxu0 %v1321
  %v1735 = vpop.f32.mrb[0].mxu0
  %v1736 = vadd.f32 0.0, %v1735
  %v1737 = vpop.f32.mrb[0].mxu0
  %1738 = vmatprep.mubr.f32.mxu0 0.0
  %1739 = vmatmul.mubr.f32.gmra.mrb[0].mxu0 %v1324
  %v1740 = vpop.f32.mrb[0].mxu0
  %v1741 = vadd.f32 0.0, %v1740
  %v1742 = vpop.f32.mrb[0].mxu0
  %1743 = vmatprep.mubr.f32.mxu0 0.0
  %1744 = vmatmul.mubr.f32.gmra.mrb[0].mxu0 %v1327
  %v1745 = vpop.f32.mrb[0].mxu0
  %v1746 = vadd.f32 0.0, %v1745
  %v1747 = vpop.f32.mrb[0].mxu0
  %1748 = vmatprep.mubr.f32.mxu0 0.0
  %1749 = vmatmul.mubr.f32.gmra.mrb[0].mxu0 %v1330
  %v1750 = vpop.f32.mrb[0].mxu0
  %v1751 = vadd.f32 0.0, %v1750
  %v1752 = vpop.f32.mrb[0].mxu0
  %1753 = vmatprep.mubr.f32.mxu0 0.0
  %1754 = vmatmul.mubr.f32.gmra.mrb[0].mxu0 %v1333
  %v1755 = vpop.f32.mrb[0].mxu0
  %v1756 = vadd.f32 0.0, %v1755
  %v1757 = vpop.f32.mrb[0].mxu0
  %1758 = vmatprep.mubr.f32.mxu0 0.0
  %1759 = vmatmul.mubr.f32.gmra.mrb[0].mxu0 %v1336
  %v1760 = vpop.f32.mrb[0].mxu0
  %v1761 = vadd.f32 0.0, %v1760
  %v1762 = vpop.f32.mrb[0].mxu0
  %1763 = vmatprep.mubr.f32.mxu0 0.0
  %1764 = vmatmul.mubr.f32.gmra.mrb[0].mxu0 %v1339
  %v1765 = vpop.f32.mrb[0].mxu0
  %v1766 = vadd.f32 0.0, %v1765
  %v1767 = vpop.f32.mrb[0].mxu0
  %1768 = vmatprep.mubr.f32.mxu0 0.0
  %1769 = vmatmul.mubr.f32.gmra.mrb[0].mxu0 %v1342
  %v1770 = vpop.f32.mrb[0].mxu0
  %v1771 = vadd.f32 0.0, %v1770
  %v1772 = vpop.f32.mrb[0].mxu0
  %1773 = vmatprep.mubr.f32.mxu0 0.0
  %1774 = vmatmul.mubr.f32.gmra.mrb[0].mxu0 %v1345
  %v1775 = vpop.f32.mrb[0].mxu0
  %v1776 = vadd.f32 0.0, %v1775
  %v1777 = vpop.f32.mrb[0].mxu0
  %1778 = vmatprep.mubr.f32.mxu0 0.0
  %1779 = vmatmul.mubr.f32.gmra.mrb[0].mxu0 %v1348
  %v1780 = vpop.f32.mrb[0].mxu0
  %v1781 = vadd.f32 0.0, %v1780
  %v1782 = vpop.f32.mrb[0].mxu0
  %1783 = vmatprep.mubr.f32.mxu0 0.0
  %1784 = vmatmul.mubr.f32.gmra.mrb[0].mxu0 %v1351
  %v1785 = vpop.f32.mrb[0].mxu0
  %v1786 = vadd.f32 0.0, %v1785
  %v1787 = vpop.f32.mrb[0].mxu0
  %1788 = vmatprep.mubr.f32.mxu0 0.0
  %1789 = vmatmul.mubr.f32.gmra.mrb[0].mxu0 %v1354
  %v1790 = vpop.f32.mrb[0].mxu0
  %v1791 = vadd.f32 0.0, %v1790
  %v1792 = vpop.f32.mrb[0].mxu0
  %1793 = vmatprep.mubr.f32.mxu0 0.0
  %1794 = vmatmul.mubr.f32.gmra.mrb[0].mxu0 %v1357
  %v1795 = vpop.f32.mrb[0].mxu0
  %v1796 = vadd.f32 0.0, %v1795
  %v1797 = vpop.f32.mrb[0].mxu0
  %1798 = vmatprep.mubr.f32.mxu0 0.0
  %1799 = vmatmul.mubr.f32.gmra.mrb[0].mxu0 %v1360
  %v1800 = vpop.f32.mrb[0].mxu0
  %v1801 = vadd.f32 0.0, %v1800
  %v1802 = vpop.f32.mrb[0].mxu0
  %1803 = vmatprep.mubr.f32.mxu0 0.0
  %1804 = vmatmul.mubr.f32.gmra.mrb[0].mxu0 %v1363
  %v1805 = vpop.f32.mrb[0].mxu0
  %v1806 = vadd.f32 0.0, %v1805
  %v1807 = vpop.f32.mrb[0].mxu0
  %1808 = vmatprep.mubr.f32.mxu0 0.0
  %1809 = vmatmul.mubr.f32.gmra.mrb[0].mxu0 %v1366
  %v1810 = vpop.f32.mrb[0].mxu0
  %v1811 = vadd.f32 0.0, %v1810
  %v1812 = vpop.f32.mrb[0].mxu0
  %1813 = vmatprep.mubr.f32.mxu0 0.0
  %1814 = vmatmul.mubr.f32.gmra.mrb[0].mxu0 %v1369
  %v1815 = vpop.f32.mrb[0].mxu0
  %v1816 = vadd.f32 0.0, %v1815
  %v1817 = vpop.f32.mrb[0].mxu0
  %1818 = vmatprep.mubr.f32.mxu0 0.0
  %1819 = vmatmul.mubr.f32.gmra.mrb[0].mxu0 %v1372
  %v1820 = vpop.f32.mrb[0].mxu0
  %v1821 = vadd.f32 0.0, %v1820
  %v1822 = vpop.f32.mrb[0].mxu0
  %1823 = vmatprep.mubr.f32.mxu0 0.0
  %1824 = vmatmul.mubr.f32.gmra.mrb[0].mxu0 %v1375
  %v1825 = vpop.f32.mrb[0].mxu0
  %v1826 = vadd.f32 0.0, %v1825
  %v1827 = vpop.f32.mrb[0].mxu0
  %1828 = vmatprep.mubr.f32.mxu0 0.0
  %1829 = vmatmul.mubr.f32.gmra.mrb[0].mxu0 %v1378
  %v1830 = vpop.f32.mrb[0].mxu0
  %v1831 = vadd.f32 0.0, %v1830
  %v1832 = vpop.f32.mrb[0].mxu0
  %1833 = vdwg.mxu0
  %v1834 = vsub.f32 %v1447, %v1756
  %v1835 = vsub.f32 %v1452, %v1761
  %v1836 = vsub.f32 %v1457, %v1766
  %v1837 = vsub.f32 %v1462, %v1771
  %v1838 = vsub.f32 %v1467, %v1776
  %v1839 = vsub.f32 %v1472, %v1781
  %v1840 = vsub.f32 %v1477, %v1786
  %v1841 = vsub.f32 %v1482, %v1791
  %v1842 = vsub.f32 %v1487, %v1796
  %v1843 = vsub.f32 %v1492, %v1801
  %v1844 = vsub.f32 %v1497, %v1806
  %v1845 = vsub.f32 %v1502, %v1811
  %v1846 = vsub.f32 %v1507, %v1816
  %v1847 = vsub.f32 %v1512, %v1821
  %v1848 = vsub.f32 %v1517, %v1826
  %v1849 = vsub.f32 %v1522, %v1831
  %v1850 = vadd.f32 %v1676, %v1527
  %v1851 = vadd.f32 %v1681, %v1532
  %v1852 = vadd.f32 %v1686, %v1537
  %v1853 = vadd.f32 %v1691, %v1542
  %v1854 = vadd.f32 %v1696, %v1547
  %v1855 = vadd.f32 %v1701, %v1552
  %v1856 = vadd.f32 %v1706, %v1557
  %v1857 = vadd.f32 %v1711, %v1562
  %v1858 = vadd.f32 %v1716, %v1567
  %v1859 = vadd.f32 %v1721, %v1572
  %v1860 = vadd.f32 %v1726, %v1577
  %v1861 = vadd.f32 %v1731, %v1582
  %v1862 = vadd.f32 %v1736, %v1587
  %v1863 = vadd.f32 %v1741, %v1592
  %v1864 = vadd.f32 %v1746, %v1597
  %v1865 = vadd.f32 %v1751, %v1602
  %v1866 = vmul.f32 %v592, %v1834
  %v1867 = vmul.f32 %v597, %v1835
  %v1868 = vmul.f32 %v602, %v1836
  %v1869 = vmul.f32 %v607, %v1837
  %v1870 = vmul.f32 %v612, %v1838
  %v1871 = vmul.f32 %v617, %v1839
  %v1872 = vmul.f32 %v622, %v1840
  %v1873 = vmul.f32 %v627, %v1841
  %v1874 = vmul.f32 %v1112, %v1842
  %v1875 = vmul.f32 %v1117, %v1843
  %v1876 = vmul.f32 %v1122, %v1844
  %v1877 = vmul.f32 %v1127, %v1845
  %v1878 = vmul.f32 %v1132, %v1846
  %v1879 = vmul.f32 %v1137, %v1847
  %v1880 = vmul.f32 %v1142, %v1848
  %v1881 = vmul.f32 %v1147, %v1849
  %v1882 = vmul.f32 %v721, %v1850
  %v1883 = vmul.f32 %v726, %v1851
  %v1884 = vmul.f32 %v731, %v1852
  %v1885 = vmul.f32 %v736, %v1853
  %v1886 = vmul.f32 %v741, %v1854
  %v1887 = vmul.f32 %v746, %v1855
  %v1888 = vmul.f32 %v751, %v1856
  %v1889 = vmul.f32 %v756, %v1857
  %v1890 = vmul.f32 %v1241, %v1858
  %v1891 = vmul.f32 %v1246, %v1859
  %v1892 = vmul.f32 %v1251, %v1860
  %v1893 = vmul.f32 %v1256, %v1861
  %v1894 = vmul.f32 %v1261, %v1862
  %v1895 = vmul.f32 %v1266, %v1863
  %v1896 = vmul.f32 %v1271, %v1864
  %v1897 = vmul.f32 %v1276, %v1865
  %v1898 = vadd.f32 %v1866, %v1882
  %v1899 = vadd.f32 %v1867, %v1883
  %v1900 = vadd.f32 %v1868, %v1884
  %v1901 = vadd.f32 %v1869, %v1885
  %v1902 = vadd.f32 %v1870, %v1886
  %v1903 = vadd.f32 %v1871, %v1887
  %v1904 = vadd.f32 %v1872, %v1888
  %v1905 = vadd.f32 %v1873, %v1889
  %v1906 = vadd.f32 %v1874, %v1890
  %v1907 = vadd.f32 %v1875, %v1891
  %v1908 = vadd.f32 %v1876, %v1892
  %v1909 = vadd.f32 %v1877, %v1893
  %v1910 = vadd.f32 %v1878, %v1894
  %v1911 = vadd.f32 %v1879, %v1895
  %v1912 = vadd.f32 %v1880, %v1896
  %v1913 = vadd.f32 %v1881, %v1897
  %v1914 = vtanh.pop %v1898
  %v1915 = vtanh.pop %v1899
  %v1916 = vtanh.pop %v1900
  %v1917 = vtanh.pop %v1901
  %v1918 = vtanh.pop %v1902
  %v1919 = vtanh.pop %v1903
  %v1920 = vtanh.pop %v1904
  %v1921 = vtanh.pop %v1905
  %v1922 = vtanh.pop %v1906
  %v1923 = vtanh.pop %v1907
  %v1924 = vtanh.pop %v1908
  %v1925 = vtanh.pop %v1909
  %v1926 = vtanh.pop %v1910
  %v1927 = vtanh.pop %v1911
  %v1928 = vtanh.pop %v1912
  %v1929 = vtanh.pop %v1913
  %v1930 = vld [vmem:[%s9] sm:$0xff]
  %v1931 = vld [vmem:[%s9 + $0x8] sm:$0xff]
  %v1932 = vld [vmem:[%s9 + $0x10] sm:$0xff]
  %v1933 = vld [vmem:[%s9 + $0x18] sm:$0xff]
  %v1934 = vld [vmem:[%s10] sm:$0xff]
  %v1935 = vld [vmem:[%s10 + $0x8] sm:$0xff]
  %v1936 = vld [vmem:[%s10 + $0x10] sm:$0xff]
  %v1937 = vld [vmem:[%s10 + $0x18] sm:$0xff]
  %v1939 = vsel %vm1283, %v463, 0
  %v1942 = vsel %vm1283, %v468, 0
  %v1945 = vsel %vm1283, %v473, 0
  %v1948 = vsel %vm1283, %v478, 0
  %v1951 = vsel %vm1283, %v483, 0
  %v1954 = vsel %vm1283, %v488, 0
  %v1957 = vsel %vm1283, %v493, 0
  %v1960 = vsel %vm1283, %v498, 0
  %v1963 = vsel %vm1283, %v983, 0
  %v1966 = vsel %vm1283, %v988, 0
  %v1969 = vsel %vm1283, %v993, 0
  %v1972 = vsel %vm1283, %v998, 0
  %v1975 = vsel %vm1283, %v1003, 0
  %v1978 = vsel %vm1283, %v1008, 0
  %v1981 = vsel %vm1283, %v1013, 0
  %v1984 = vsel %vm1283, %v1018, 0
  %1986 = vmatprep.subr.mxu0 0.0
  %1987 = vmatpush1.msra.mxu0 %v1934
  %1988 = vmatprep.subr.mxu0 0.0
  %1989 = vmatpush1.msra.mxu0 %v1935
  %1990 = vmatprep.subr.mxu0 0.0
  %1991 = vmatpush1.msra.mxu0 %v1936
  %1992 = vmatprep.subr.mxu0 0.0
  %1993 = vmatpush1.msra.mxu0 %v1937
  %1994 = vmatprep.subr.mxu0 0.0
  %1995 = vmatpush1.msra.mxu0 0.0
  %1996 = vmatprep.subr.mxu0 0.0
  %1997 = vmatpush1.msra.mxu0 0.0
  %1998 = vmatprep.subr.mxu0 0.0
  %1999 = vmatpush1.msra.mxu0 0.0
  %2000 = vmatprep.subr.mxu0 0.0
  %2001 = vmatpush1.msra.mxu0 0.0
  %2002 = vmatprep.subr.mxu0 0.0
  %2003 = vmatpush1.msra.mxu0 0.0
  %2004 = vmatprep.subr.mxu0 0.0
  %2005 = vmatpush1.msra.mxu0 0.0
  %2006 = vmatprep.subr.mxu0 0.0
  %2007 = vmatpush1.msra.mxu0 0.0
  %2008 = vmatprep.subr.mxu0 0.0
  %2009 = vmatpush1.msra.mxu0 0.0
  %2010 = vmatprep.subr.mxu0 0.0
  %2011 = vmatpush1.msra.mxu0 0.0
  %2012 = vmatprep.subr.mxu0 0.0
  %2013 = vmatpush1.msra.mxu0 0.0
  %2014 = vmatprep.subr.mxu0 0.0
  %2015 = vmatpush1.msra.mxu0 0.0
  %2016 = vmatprep.subr.mxu0 0.0
  %2017 = vmatpush1.msra.mxu0 0.0
  %2018 = vmatprep.subr.mxu0 0.0
  %2019 = vmatpush1.msra.mxu0 0.0
  %2020 = vmatprep.subr.mxu0 0.0
  %2021 = vmatpush1.msra.mxu0 0.0
  %2022 = vmatprep.subr.mxu0 0.0
  %2023 = vmatpush1.msra.mxu0 0.0
  %2024 = vmatprep.subr.mxu0 0.0
  %2025 = vmatpush1.msra.mxu0 0.0
  %2026 = vmatprep.subr.mxu0 0.0
  %2027 = vmatpush1.msra.mxu0 0.0
  %2028 = vmatprep.subr.mxu0 0.0
  %2029 = vmatpush1.msra.mxu0 0.0
  %2030 = vmatprep.subr.mxu0 0.0
  %2031 = vmatpush1.msra.mxu0 0.0
  %2032 = vmatprep.subr.mxu0 0.0
  %2033 = vmatpush1.msra.mxu0 0.0
  %2034 = vmatprep.subr.mxu0 0.0
  %2035 = vmatpush1.msra.mxu0 0.0
  %2036 = vmatprep.subr.mxu0 0.0
  %2037 = vmatpush1.msra.mxu0 0.0
  %2038 = vmatprep.subr.mxu0 0.0
  %2039 = vmatpush1.msra.mxu0 0.0
  %2040 = vmatprep.subr.mxu0 0.0
  %2041 = vmatpush1.msra.mxu0 0.0
  %2042 = vmatprep.subr.mxu0 0.0
  %2043 = vmatpush1.msra.mxu0 0.0
  %2044 = vmatprep.subr.mxu0 0.0
  %2045 = vmatpush1.msra.mxu0 0.0
  %2046 = vmatprep.subr.mxu0 0.0
  %2047 = vmatpush1.msra.mxu0 0.0
  %2048 = vmatprep.subr.mxu0 0.0
  %2049 = vmatpush1.msra.mxu0 0.0
  %2050 = vmatprep.mubr.f32.mxu0 0.0
  %2051 = vmatmul.mubr.f32.gmra.mrb[0].mxu0 %v1939
  %v2052 = vpop.f32.mrb[0].mxu0
  %v2053 = vadd.f32 0.0, %v2052
  %v2054 = vpop.f32.mrb[0].mxu0
  %2055 = vmatprep.mubr.f32.mxu0 0.0
  %2056 = vmatmul.mubr.f32.gmra.mrb[0].mxu0 %v1942
  %v2057 = vpop.f32.mrb[0].mxu0
  %v2058 = vadd.f32 0.0, %v2057
  %v2059 = vpop.f32.mrb[0].mxu0
  %2060 = vmatprep.mubr.f32.mxu0 0.0
  %2061 = vmatmul.mubr.f32.gmra.mrb[0].mxu0 %v1945
  %v2062 = vpop.f32.mrb[0].mxu0
  %v2063 = vadd.f32 0.0, %v2062
  %v2064 = vpop.f32.mrb[0].mxu0
  %2065 = vmatprep.mubr.f32.mxu0 0.0
  %2066 = vmatmul.mubr.f32.gmra.mrb[0].mxu0 %v1948
  %v2067 = vpop.f32.mrb[0].mxu0
  %v2068 = vadd.f32 0.0, %v2067
  %v2069 = vpop.f32.mrb[0].mxu0
  %2070 = vmatprep.mubr.f32.mxu0 0.0
  %2071 = vmatmul.mubr.f32.gmra.mrb[0].mxu0 %v1951
  %v2072 = vpop.f32.mrb[0].mxu0
  %v2073 = vadd.f32 0.0, %v2072
  %v2074 = vpop.f32.mrb[0].mxu0
  %2075 = vmatprep.mubr.f32.mxu0 0.0
  %2076 = vmatmul.mubr.f32.gmra.mrb[0].mxu0 %v1954
  %v2077 = vpop.f32.mrb[0].mxu0
  %v2078 = vadd.f32 0.0, %v2077
  %v2079 = vpop.f32.mrb[0].mxu0
  %2080 = vmatprep.mubr.f32.mxu0 0.0
  %2081 = vmatmul.mubr.f32.gmra.mrb[0].mxu0 %v1957
  %v2082 = vpop.f32.mrb[0].mxu0
  %v2083 = vadd.f32 0.0, %v2082
  %v2084 = vpop.f32.mrb[0].mxu0
  %2085 = vmatprep.mubr.f32.mxu0 0.0
  %2086 = vmatmul.mubr.f32.gmra.mrb[0].mxu0 %v1960
  %v2087 = vpop.f32.mrb[0].mxu0
  %v2088 = vadd.f32 0.0, %v2087
  %v2089 = vpop.f32.mrb[0].mxu0
  %2090 = vmatprep.mubr.f32.mxu0 0.0
  %2091 = vmatmul.mubr.f32.gmra.mrb[0].mxu0 %v1963
  %v2092 = vpop.f32.mrb[0].mxu0
  %v2093 = vadd.f32 0.0, %v2092
  %v2094 = vpop.f32.mrb[0].mxu0
  %2095 = vmatprep.mubr.f32.mxu0 0.0
  %2096 = vmatmul.mubr.f32.gmra.mrb[0].mxu0 %v1966
  %v2097 = vpop.f32.mrb[0].mxu0
  %v2098 = vadd.f32 0.0, %v2097
  %v2099 = vpop.f32.mrb[0].mxu0
  %2100 = vmatprep.mubr.f32.mxu0 0.0
  %2101 = vmatmul.mubr.f32.gmra.mrb[0].mxu0 %v1969
  %v2102 = vpop.f32.mrb[0].mxu0
  %v2103 = vadd.f32 0.0, %v2102
  %v2104 = vpop.f32.mrb[0].mxu0
  %2105 = vmatprep.mubr.f32.mxu0 0.0
  %2106 = vmatmul.mubr.f32.gmra.mrb[0].mxu0 %v1972
  %v2107 = vpop.f32.mrb[0].mxu0
  %v2108 = vadd.f32 0.0, %v2107
  %v2109 = vpop.f32.mrb[0].mxu0
  %2110 = vmatprep.mubr.f32.mxu0 0.0
  %2111 = vmatmul.mubr.f32.gmra.mrb[0].mxu0 %v1975
  %v2112 = vpop.f32.mrb[0].mxu0
  %v2113 = vadd.f32 0.0, %v2112
  %v2114 = vpop.f32.mrb[0].mxu0
  %2115 = vmatprep.mubr.f32.mxu0 0.0
  %2116 = vmatmul.mubr.f32.gmra.mrb[0].mxu0 %v1978
  %v2117 = vpop.f32.mrb[0].mxu0
  %v2118 = vadd.f32 0.0, %v2117
  %v2119 = vpop.f32.mrb[0].mxu0
  %2120 = vmatprep.mubr.f32.mxu0 0.0
  %2121 = vmatmul.mubr.f32.gmra.mrb[0].mxu0 %v1981
  %v2122 = vpop.f32.mrb[0].mxu0
  %v2123 = vadd.f32 0.0, %v2122
  %v2124 = vpop.f32.mrb[0].mxu0
  %2125 = vmatprep.mubr.f32.mxu0 0.0
  %2126 = vmatmul.mubr.f32.gmra.mrb[0].mxu0 %v1984
  %v2127 = vpop.f32.mrb[0].mxu0
  %v2128 = vadd.f32 0.0, %v2127
  %v2129 = vpop.f32.mrb[0].mxu0
  %2130 = vdwg.mxu0
  %v2132 = vsel %vm1283, %v50, 0
  %v2135 = vsel %vm1283, %v51, 0
  %v2138 = vsel %vm1283, %v52, 0
  %v2141 = vsel %vm1283, %v53, 0
  %v2144 = vsel %vm1283, %v54, 0
  %v2147 = vsel %vm1283, %v55, 0
  %v2150 = vsel %vm1283, %v56, 0
  %v2153 = vsel %vm1283, %v57, 0
  %v2156 = vsel %vm1283, %v58, 0
  %v2159 = vsel %vm1283, %v59, 0
  %v2162 = vsel %vm1283, %v60, 0
  %v2165 = vsel %vm1283, %v61, 0
  %v2168 = vsel %vm1283, %v62, 0
  %v2171 = vsel %vm1283, %v63, 0
  %v2174 = vsel %vm1283, %v64, 0
  %v2177 = vsel %vm1283, %v65, 0
  %2179 = vmatprep.subr.mxu0 0.0
  %2180 = vmatpush1.msra.mxu0 %v1930
  %2181 = vmatprep.subr.mxu0 0.0
  %2182 = vmatpush1.msra.mxu0 %v1931
  %2183 = vmatprep.subr.mxu0 0.0
  %2184 = vmatpush1.msra.mxu0 %v1932
  %2185 = vmatprep.subr.mxu0 0.0
  %2186 = vmatpush1.msra.mxu0 %v1933
  %2187 = vmatprep.subr.mxu0 0.0
  %2188 = vmatpush1.msra.mxu0 0.0
  %2189 = vmatprep.subr.mxu0 0.0
  %2190 = vmatpush1.msra.mxu0 0.0
  %2191 = vmatprep.subr.mxu0 0.0
  %2192 = vmatpush1.msra.mxu0 0.0
  %2193 = vmatprep.subr.mxu0 0.0
  %2194 = vmatpush1.msra.mxu0 0.0
  %2195 = vmatprep.subr.mxu0 0.0
  %2196 = vmatpush1.msra.mxu0 0.0
  %2197 = vmatprep.subr.mxu0 0.0
  %2198 = vmatpush1.msra.mxu0 0.0
  %2199 = vmatprep.subr.mxu0 0.0
  %2200 = vmatpush1.msra.mxu0 0.0
  %2201 = vmatprep.subr.mxu0 0.0
  %2202 = vmatpush1.msra.mxu0 0.0
  %2203 = vmatprep.subr.mxu0 0.0
  %2204 = vmatpush1.msra.mxu0 0.0
  %2205 = vmatprep.subr.mxu0 0.0
  %2206 = vmatpush1.msra.mxu0 0.0
  %2207 = vmatprep.subr.mxu0 0.0
  %2208 = vmatpush1.msra.mxu0 0.0
  %2209 = vmatprep.subr.mxu0 0.0
  %2210 = vmatpush1.msra.mxu0 0.0
  %2211 = vmatprep.subr.mxu0 0.0
  %2212 = vmatpush1.msra.mxu0 0.0
  %2213 = vmatprep.subr.mxu0 0.0
  %2214 = vmatpush1.msra.mxu0 0.0
  %2215 = vmatprep.subr.mxu0 0.0
  %2216 = vmatpush1.msra.mxu0 0.0
  %2217 = vmatprep.subr.mxu0 0.0
  %2218 = vmatpush1.msra.mxu0 0.0
  %2219 = vmatprep.subr.mxu0 0.0
  %2220 = vmatpush1.msra.mxu0 0.0
  %2221 = vmatprep.subr.mxu0 0.0
  %2222 = vmatpush1.msra.mxu0 0.0
  %2223 = vmatprep.subr.mxu0 0.0
  %2224 = vmatpush1.msra.mxu0 0.0
  %2225 = vmatprep.subr.mxu0 0.0
  %2226 = vmatpush1.msra.mxu0 0.0
  %2227 = vmatprep.subr.mxu0 0.0
  %2228 = vmatpush1.msra.mxu0 0.0
  %2229 = vmatprep.subr.mxu0 0.0
  %2230 = vmatpush1.msra.mxu0 0.0
  %2231 = vmatprep.subr.mxu0 0.0
  %2232 = vmatpush1.msra.mxu0 0.0
  %2233 = vmatprep.subr.mxu0 0.0
  %2234 = vmatpush1.msra.mxu0 0.0
  %2235 = vmatprep.subr.mxu0 0.0
  %2236 = vmatpush1.msra.mxu0 0.0
  %2237 = vmatprep.subr.mxu0 0.0
  %2238 = vmatpush1.msra.mxu0 0.0
  %2239 = vmatprep.subr.mxu0 0.0
  %2240 = vmatpush1.msra.mxu0 0.0
  %2241 = vmatprep.subr.mxu0 0.0
  %2242 = vmatpush1.msra.mxu0 0.0
  %2243 = vmatprep.mubr.f32.mxu0 0.0
  %2244 = vmatmul.mubr.f32.gmra.mrb[0].mxu0 %v2132
  %v2245 = vpop.f32.mrb[0].mxu0
  %v2246 = vadd.f32 %v2053, %v2245
  %v2247 = vpop.f32.mrb[0].mxu0
  %2248 = vmatprep.mubr.f32.mxu0 0.0
  %2249 = vmatmul.mubr.f32.gmra.mrb[0].mxu0 %v2135
  %v2250 = vpop.f32.mrb[0].mxu0
  %v2251 = vadd.f32 %v2058, %v2250
  %v2252 = vpop.f32.mrb[0].mxu0
  %2253 = vmatprep.mubr.f32.mxu0 0.0
  %2254 = vmatmul.mubr.f32.gmra.mrb[0].mxu0 %v2138
  %v2255 = vpop.f32.mrb[0].mxu0
  %v2256 = vadd.f32 %v2063, %v2255
  %v2257 = vpop.f32.mrb[0].mxu0
  %2258 = vmatprep.mubr.f32.mxu0 0.0
  %2259 = vmatmul.mubr.f32.gmra.mrb[0].mxu0 %v2141
  %v2260 = vpop.f32.mrb[0].mxu0
  %v2261 = vadd.f32 %v2068, %v2260
  %v2262 = vpop.f32.mrb[0].mxu0
  %2263 = vmatprep.mubr.f32.mxu0 0.0
  %2264 = vmatmul.mubr.f32.gmra.mrb[0].mxu0 %v2144
  %v2265 = vpop.f32.mrb[0].mxu0
  %v2266 = vadd.f32 %v2073, %v2265
  %v2267 = vpop.f32.mrb[0].mxu0
  %2268 = vmatprep.mubr.f32.mxu0 0.0
  %2269 = vmatmul.mubr.f32.gmra.mrb[0].mxu0 %v2147
  %v2270 = vpop.f32.mrb[0].mxu0
  %v2271 = vadd.f32 %v2078, %v2270
  %v2272 = vpop.f32.mrb[0].mxu0
  %2273 = vmatprep.mubr.f32.mxu0 0.0
  %2274 = vmatmul.mubr.f32.gmra.mrb[0].mxu0 %v2150
  %v2275 = vpop.f32.mrb[0].mxu0
  %v2276 = vadd.f32 %v2083, %v2275
  %v2277 = vpop.f32.mrb[0].mxu0
  %2278 = vmatprep.mubr.f32.mxu0 0.0
  %2279 = vmatmul.mubr.f32.gmra.mrb[0].mxu0 %v2153
  %v2280 = vpop.f32.mrb[0].mxu0
  %v2281 = vadd.f32 %v2088, %v2280
  %v2282 = vpop.f32.mrb[0].mxu0
  %2283 = vmatprep.mubr.f32.mxu0 0.0
  %2284 = vmatmul.mubr.f32.gmra.mrb[0].mxu0 %v2156
  %v2285 = vpop.f32.mrb[0].mxu0
  %v2286 = vadd.f32 %v2093, %v2285
  %v2287 = vpop.f32.mrb[0].mxu0
  %2288 = vmatprep.mubr.f32.mxu0 0.0
  %2289 = vmatmul.mubr.f32.gmra.mrb[0].mxu0 %v2159
  %v2290 = vpop.f32.mrb[0].mxu0
  %v2291 = vadd.f32 %v2098, %v2290
  %v2292 = vpop.f32.mrb[0].mxu0
  %2293 = vmatprep.mubr.f32.mxu0 0.0
  %2294 = vmatmul.mubr.f32.gmra.mrb[0].mxu0 %v2162
  %v2295 = vpop.f32.mrb[0].mxu0
  %v2296 = vadd.f32 %v2103, %v2295
  %v2297 = vpop.f32.mrb[0].mxu0
  %2298 = vmatprep.mubr.f32.mxu0 0.0
  %2299 = vmatmul.mubr.f32.gmra.mrb[0].mxu0 %v2165
  %v2300 = vpop.f32.mrb[0].mxu0
  %v2301 = vadd.f32 %v2108, %v2300
  %v2302 = vpop.f32.mrb[0].mxu0
  %2303 = vmatprep.mubr.f32.mxu0 0.0
  %2304 = vmatmul.mubr.f32.gmra.mrb[0].mxu0 %v2168
  %v2305 = vpop.f32.mrb[0].mxu0
  %v2306 = vadd.f32 %v2113, %v2305
  %v2307 = vpop.f32.mrb[0].mxu0
  %2308 = vmatprep.mubr.f32.mxu0 0.0
  %2309 = vmatmul.mubr.f32.gmra.mrb[0].mxu0 %v2171
  %v2310 = vpop.f32.mrb[0].mxu0
  %v2311 = vadd.f32 %v2118, %v2310
  %v2312 = vpop.f32.mrb[0].mxu0
  %2313 = vmatprep.mubr.f32.mxu0 0.0
  %2314 = vmatmul.mubr.f32.gmra.mrb[0].mxu0 %v2174
  %v2315 = vpop.f32.mrb[0].mxu0
  %v2316 = vadd.f32 %v2123, %v2315
  %v2317 = vpop.f32.mrb[0].mxu0
  %2318 = vmatprep.mubr.f32.mxu0 0.0
  %2319 = vmatmul.mubr.f32.gmra.mrb[0].mxu0 %v2177
  %v2320 = vpop.f32.mrb[0].mxu0
  %v2321 = vadd.f32 %v2128, %v2320
  %v2322 = vpop.f32.mrb[0].mxu0
  %2323 = vdwg.mxu0
  %v2324 = vld [vmem:[%s11] sm:$0xff]
  %v2325 = vld [vmem:[%s11 + $0x8] sm:$0xff]
  %v2326 = vld [vmem:[%s11 + $0x10] sm:$0xff]
  %v2327 = vld [vmem:[%s11 + $0x18] sm:$0xff]
  %v2329 = vsel %vm1283, %v1914, 0
  %v2332 = vsel %vm1283, %v1915, 0
  %v2335 = vsel %vm1283, %v1916, 0
  %v2338 = vsel %vm1283, %v1917, 0
  %v2341 = vsel %vm1283, %v1918, 0
  %v2344 = vsel %vm1283, %v1919, 0
  %v2347 = vsel %vm1283, %v1920, 0
  %v2350 = vsel %vm1283, %v1921, 0
  %v2353 = vsel %vm1283, %v1922, 0
  %v2356 = vsel %vm1283, %v1923, 0
  %v2359 = vsel %vm1283, %v1924, 0
  %v2362 = vsel %vm1283, %v1925, 0
  %v2365 = vsel %vm1283, %v1926, 0
  %v2368 = vsel %vm1283, %v1927, 0
  %v2371 = vsel %vm1283, %v1928, 0
  %v2374 = vsel %vm1283, %v1929, 0
  %2376 = vmatprep.subr.mxu0 0.0
  %2377 = vmatpush1.msra.mxu0 %v2324
  %2378 = vmatprep.subr.mxu0 0.0
  %2379 = vmatpush1.msra.mxu0 %v2325
  %2380 = vmatprep.subr.mxu0 0.0
  %2381 = vmatpush1.msra.mxu0 %v2326
  %2382 = vmatprep.subr.mxu0 0.0
  %2383 = vmatpush1.msra.mxu0 %v2327
  %2384 = vmatprep.subr.mxu0 0.0
  %2385 = vmatpush1.msra.mxu0 0.0
  %2386 = vmatprep.subr.mxu0 0.0
  %2387 = vmatpush1.msra.mxu0 0.0
  %2388 = vmatprep.subr.mxu0 0.0
  %2389 = vmatpush1.msra.mxu0 0.0
  %2390 = vmatprep.subr.mxu0 0.0
  %2391 = vmatpush1.msra.mxu0 0.0
  %2392 = vmatprep.subr.mxu0 0.0
  %2393 = vmatpush1.msra.mxu0 0.0
  %2394 = vmatprep.subr.mxu0 0.0
  %2395 = vmatpush1.msra.mxu0 0.0
  %2396 = vmatprep.subr.mxu0 0.0
  %2397 = vmatpush1.msra.mxu0 0.0
  %2398 = vmatprep.subr.mxu0 0.0
  %2399 = vmatpush1.msra.mxu0 0.0
  %2400 = vmatprep.subr.mxu0 0.0
  %2401 = vmatpush1.msra.mxu0 0.0
  %2402 = vmatprep.subr.mxu0 0.0
  %2403 = vmatpush1.msra.mxu0 0.0
  %2404 = vmatprep.subr.mxu0 0.0
  %2405 = vmatpush1.msra.mxu0 0.0
  %2406 = vmatprep.subr.mxu0 0.0
  %2407 = vmatpush1.msra.mxu0 0.0
  %2408 = vmatprep.subr.mxu0 0.0
  %2409 = vmatpush1.msra.mxu0 0.0
  %2410 = vmatprep.subr.mxu0 0.0
  %2411 = vmatpush1.msra.mxu0 0.0
  %2412 = vmatprep.subr.mxu0 0.0
  %2413 = vmatpush1.msra.mxu0 0.0
  %2414 = vmatprep.subr.mxu0 0.0
  %2415 = vmatpush1.msra.mxu0 0.0
  %2416 = vmatprep.subr.mxu0 0.0
  %2417 = vmatpush1.msra.mxu0 0.0
  %2418 = vmatprep.subr.mxu0 0.0
  %2419 = vmatpush1.msra.mxu0 0.0
  %2420 = vmatprep.subr.mxu0 0.0
  %2421 = vmatpush1.msra.mxu0 0.0
  %2422 = vmatprep.subr.mxu0 0.0
  %2423 = vmatpush1.msra.mxu0 0.0
  %2424 = vmatprep.subr.mxu0 0.0
  %2425 = vmatpush1.msra.mxu0 0.0
  %2426 = vmatprep.subr.mxu0 0.0
  %2427 = vmatpush1.msra.mxu0 0.0
  %2428 = vmatprep.subr.mxu0 0.0
  %2429 = vmatpush1.msra.mxu0 0.0
  %2430 = vmatprep.subr.mxu0 0.0
  %2431 = vmatpush1.msra.mxu0 0.0
  %2432 = vmatprep.subr.mxu0 0.0
  %2433 = vmatpush1.msra.mxu0 0.0
  %2434 = vmatprep.subr.mxu0 0.0
  %2435 = vmatpush1.msra.mxu0 0.0
  %2436 = vmatprep.subr.mxu0 0.0
  %2437 = vmatpush1.msra.mxu0 0.0
  %2438 = vmatprep.subr.mxu0 0.0
  %2439 = vmatpush1.msra.mxu0 0.0
  %2440 = vmatprep.mubr.f32.mxu0 0.0
  %2441 = vmatmul.mubr.f32.gmra.mrb[0].mxu0 %v2329
  %v2442 = vpop.f32.mrb[0].mxu0
  %v2443 = vadd.f32 0.0, %v2442
  %v2444 = vpop.f32.mrb[0].mxu0
  %2445 = vmatprep.mubr.f32.mxu0 0.0
  %2446 = vmatmul.mubr.f32.gmra.mrb[0].mxu0 %v2332
  %v2447 = vpop.f32.mrb[0].mxu0
  %v2448 = vadd.f32 0.0, %v2447
  %v2449 = vpop.f32.mrb[0].mxu0
  %2450 = vmatprep.mubr.f32.mxu0 0.0
  %2451 = vmatmul.mubr.f32.gmra.mrb[0].mxu0 %v2335
  %v2452 = vpop.f32.mrb[0].mxu0
  %v2453 = vadd.f32 0.0, %v2452
  %v2454 = vpop.f32.mrb[0].mxu0
  %2455 = vmatprep.mubr.f32.mxu0 0.0
  %2456 = vmatmul.mubr.f32.gmra.mrb[0].mxu0 %v2338
  %v2457 = vpop.f32.mrb[0].mxu0
  %v2458 = vadd.f32 0.0, %v2457
  %v2459 = vpop.f32.mrb[0].mxu0
  %2460 = vmatprep.mubr.f32.mxu0 0.0
  %2461 = vmatmul.mubr.f32.gmra.mrb[0].mxu0 %v2341
  %v2462 = vpop.f32.mrb[0].mxu0
  %v2463 = vadd.f32 0.0, %v2462
  %v2464 = vpop.f32.mrb[0].mxu0
  %2465 = vmatprep.mubr.f32.mxu0 0.0
  %2466 = vmatmul.mubr.f32.gmra.mrb[0].mxu0 %v2344
  %v2467 = vpop.f32.mrb[0].mxu0
  %v2468 = vadd.f32 0.0, %v2467
  %v2469 = vpop.f32.mrb[0].mxu0
  %2470 = vmatprep.mubr.f32.mxu0 0.0
  %2471 = vmatmul.mubr.f32.gmra.mrb[0].mxu0 %v2347
  %v2472 = vpop.f32.mrb[0].mxu0
  %v2473 = vadd.f32 0.0, %v2472
  %v2474 = vpop.f32.mrb[0].mxu0
  %2475 = vmatprep.mubr.f32.mxu0 0.0
  %2476 = vmatmul.mubr.f32.gmra.mrb[0].mxu0 %v2350
  %v2477 = vpop.f32.mrb[0].mxu0
  %v2478 = vadd.f32 0.0, %v2477
  %v2479 = vpop.f32.mrb[0].mxu0
  %2480 = vmatprep.mubr.f32.mxu0 0.0
  %2481 = vmatmul.mubr.f32.gmra.mrb[0].mxu0 %v2353
  %v2482 = vpop.f32.mrb[0].mxu0
  %v2483 = vadd.f32 0.0, %v2482
  %v2484 = vpop.f32.mrb[0].mxu0
  %2485 = vmatprep.mubr.f32.mxu0 0.0
  %2486 = vmatmul.mubr.f32.gmra.mrb[0].mxu0 %v2356
  %v2487 = vpop.f32.mrb[0].mxu0
  %v2488 = vadd.f32 0.0, %v2487
  %v2489 = vpop.f32.mrb[0].mxu0
  %2490 = vmatprep.mubr.f32.mxu0 0.0
  %2491 = vmatmul.mubr.f32.gmra.mrb[0].mxu0 %v2359
  %v2492 = vpop.f32.mrb[0].mxu0
  %v2493 = vadd.f32 0.0, %v2492
  %v2494 = vpop.f32.mrb[0].mxu0
  %2495 = vmatprep.mubr.f32.mxu0 0.0
  %2496 = vmatmul.mubr.f32.gmra.mrb[0].mxu0 %v2362
  %v2497 = vpop.f32.mrb[0].mxu0
  %v2498 = vadd.f32 0.0, %v2497
  %v2499 = vpop.f32.mrb[0].mxu0
  %2500 = vmatprep.mubr.f32.mxu0 0.0
  %2501 = vmatmul.mubr.f32.gmra.mrb[0].mxu0 %v2365
  %v2502 = vpop.f32.mrb[0].mxu0
  %v2503 = vadd.f32 0.0, %v2502
  %v2504 = vpop.f32.mrb[0].mxu0
  %2505 = vmatprep.mubr.f32.mxu0 0.0
  %2506 = vmatmul.mubr.f32.gmra.mrb[0].mxu0 %v2368
  %v2507 = vpop.f32.mrb[0].mxu0
  %v2508 = vadd.f32 0.0, %v2507
  %v2509 = vpop.f32.mrb[0].mxu0
  %2510 = vmatprep.mubr.f32.mxu0 0.0
  %2511 = vmatmul.mubr.f32.gmra.mrb[0].mxu0 %v2371
  %v2512 = vpop.f32.mrb[0].mxu0
  %v2513 = vadd.f32 0.0, %v2512
  %v2514 = vpop.f32.mrb[0].mxu0
  %2515 = vmatprep.mubr.f32.mxu0 0.0
  %2516 = vmatmul.mubr.f32.gmra.mrb[0].mxu0 %v2374
  %v2517 = vpop.f32.mrb[0].mxu0
  %v2518 = vadd.f32 0.0, %v2517
  %v2519 = vpop.f32.mrb[0].mxu0
  %2520 = vdwg.mxu0
  %v2521 = vadd.f32 %v2246, %v2443
  %v2522 = vadd.f32 %v2251, %v2448
  %v2523 = vadd.f32 %v2256, %v2453
  %v2524 = vadd.f32 %v2261, %v2458
  %v2525 = vadd.f32 %v2266, %v2463
  %v2526 = vadd.f32 %v2271, %v2468
  %v2527 = vadd.f32 %v2276, %v2473
  %v2528 = vadd.f32 %v2281, %v2478
  %v2529 = vadd.f32 %v2286, %v2483
  %v2530 = vadd.f32 %v2291, %v2488
  %v2531 = vadd.f32 %v2296, %v2493
  %v2532 = vadd.f32 %v2301, %v2498
  %v2533 = vadd.f32 %v2306, %v2503
  %v2534 = vadd.f32 %v2311, %v2508
  %v2535 = vadd.f32 %v2316, %v2513
  %v2536 = vadd.f32 %v2321, %v2518
  %v2537 = vld [vmem:[%s12] sm:$0x1]
  %v2539 = vlaneseq
  %v2540 = vshrl.u32 %v2539, 7
  %v2541 = vsub.s32 0, %v2540
  %v2542 = vrot.slane %v2537, %v2541
  %v2544 = vadd.f32 %v2521, %v2542
  %v2545 = vadd.f32 %v2522, %v2542
  %v2546 = vadd.f32 %v2523, %v2542
  %v2547 = vadd.f32 %v2524, %v2542
  %v2548 = vadd.f32 %v2525, %v2542
  %v2549 = vadd.f32 %v2526, %v2542
  %v2550 = vadd.f32 %v2527, %v2542
  %v2551 = vadd.f32 %v2528, %v2542
  %v2552 = vadd.f32 %v2529, %v2542
  %v2553 = vadd.f32 %v2530, %v2542
  %v2554 = vadd.f32 %v2531, %v2542
  %v2555 = vadd.f32 %v2532, %v2542
  %v2556 = vadd.f32 %v2533, %v2542
  %v2557 = vadd.f32 %v2534, %v2542
  %v2558 = vadd.f32 %v2535, %v2542
  %v2559 = vadd.f32 %v2536, %v2542
  %v2560 = vmax.f32 %v2544, 0.0
  %v2561 = vmax.f32 %v2545, 0.0
  %v2562 = vmax.f32 %v2546, 0.0
  %v2563 = vmax.f32 %v2547, 0.0
  %v2564 = vmax.f32 %v2548, 0.0
  %v2565 = vmax.f32 %v2549, 0.0
  %v2566 = vmax.f32 %v2550, 0.0
  %v2567 = vmax.f32 %v2551, 0.0
  %v2568 = vmax.f32 %v2552, 0.0
  %v2569 = vmax.f32 %v2553, 0.0
  %v2570 = vmax.f32 %v2554, 0.0
  %v2571 = vmax.f32 %v2555, 0.0
  %v2572 = vmax.f32 %v2556, 0.0
  %v2573 = vmax.f32 %v2557, 0.0
  %v2574 = vmax.f32 %v2558, 0.0
  %v2575 = vmax.f32 %v2559, 0.0
  %v2576 = vld [vmem:[%s13] sm:$0xff]
  %v2577 = vld [vmem:[%s13 + $0x8] sm:$0xff]
  %v2578 = vld [vmem:[%s13 + $0x10] sm:$0xff]
  %v2579 = vld [vmem:[%s13 + $0x18] sm:$0xff]
  %v2580 = vld [vmem:[%s14] sm:$0x1]
  %v2582 = vlaneseq
  %v2583 = vshrl.u32 %v2582, 7
  %v2584 = vsub.s32 0, %v2583
  %v2585 = vrot.slane %v2580, %v2584
  %v2588 = vsel %vm1283, %v2560, 0
  %v2591 = vsel %vm1283, %v2561, 0
  %v2594 = vsel %vm1283, %v2562, 0
  %v2597 = vsel %vm1283, %v2563, 0
  %v2600 = vsel %vm1283, %v2564, 0
  %v2603 = vsel %vm1283, %v2565, 0
  %v2606 = vsel %vm1283, %v2566, 0
  %v2609 = vsel %vm1283, %v2567, 0
  %v2612 = vsel %vm1283, %v2568, 0
  %v2615 = vsel %vm1283, %v2569, 0
  %v2618 = vsel %vm1283, %v2570, 0
  %v2621 = vsel %vm1283, %v2571, 0
  %v2624 = vsel %vm1283, %v2572, 0
  %v2627 = vsel %vm1283, %v2573, 0
  %v2630 = vsel %vm1283, %v2574, 0
  %v2633 = vsel %vm1283, %v2575, 0
  %2635 = vmatprep.subr.mxu0 0.0
  %2636 = vmatpush1.msra.mxu0 %v2576
  %2637 = vmatprep.subr.mxu0 0.0
  %2638 = vmatpush1.msra.mxu0 %v2577
  %2639 = vmatprep.subr.mxu0 0.0
  %2640 = vmatpush1.msra.mxu0 %v2578
  %2641 = vmatprep.subr.mxu0 0.0
  %2642 = vmatpush1.msra.mxu0 %v2579
  %2643 = vmatprep.subr.mxu0 0.0
  %2644 = vmatpush1.msra.mxu0 0.0
  %2645 = vmatprep.subr.mxu0 0.0
  %2646 = vmatpush1.msra.mxu0 0.0
  %2647 = vmatprep.subr.mxu0 0.0
  %2648 = vmatpush1.msra.mxu0 0.0
  %2649 = vmatprep.subr.mxu0 0.0
  %2650 = vmatpush1.msra.mxu0 0.0
  %2651 = vmatprep.subr.mxu0 0.0
  %2652 = vmatpush1.msra.mxu0 0.0
  %2653 = vmatprep.subr.mxu0 0.0
  %2654 = vmatpush1.msra.mxu0 0.0
  %2655 = vmatprep.subr.mxu0 0.0
  %2656 = vmatpush1.msra.mxu0 0.0
  %2657 = vmatprep.subr.mxu0 0.0
  %2658 = vmatpush1.msra.mxu0 0.0
  %2659 = vmatprep.subr.mxu0 0.0
  %2660 = vmatpush1.msra.mxu0 0.0
  %2661 = vmatprep.subr.mxu0 0.0
  %2662 = vmatpush1.msra.mxu0 0.0
  %2663 = vmatprep.subr.mxu0 0.0
  %2664 = vmatpush1.msra.mxu0 0.0
  %2665 = vmatprep.subr.mxu0 0.0
  %2666 = vmatpush1.msra.mxu0 0.0
  %2667 = vmatprep.subr.mxu0 0.0
  %2668 = vmatpush1.msra.mxu0 0.0
  %2669 = vmatprep.subr.mxu0 0.0
  %2670 = vmatpush1.msra.mxu0 0.0
  %2671 = vmatprep.subr.mxu0 0.0
  %2672 = vmatpush1.msra.mxu0 0.0
  %2673 = vmatprep.subr.mxu0 0.0
  %2674 = vmatpush1.msra.mxu0 0.0
  %2675 = vmatprep.subr.mxu0 0.0
  %2676 = vmatpush1.msra.mxu0 0.0
  %2677 = vmatprep.subr.mxu0 0.0
  %2678 = vmatpush1.msra.mxu0 0.0
  %2679 = vmatprep.subr.mxu0 0.0
  %2680 = vmatpush1.msra.mxu0 0.0
  %2681 = vmatprep.subr.mxu0 0.0
  %2682 = vmatpush1.msra.mxu0 0.0
  %2683 = vmatprep.subr.mxu0 0.0
  %2684 = vmatpush1.msra.mxu0 0.0
  %2685 = vmatprep.subr.mxu0 0.0
  %2686 = vmatpush1.msra.mxu0 0.0
  %2687 = vmatprep.subr.mxu0 0.0
  %2688 = vmatpush1.msra.mxu0 0.0
  %2689 = vmatprep.subr.mxu0 0.0
  %2690 = vmatpush1.msra.mxu0 0.0
  %2691 = vmatprep.subr.mxu0 0.0
  %2692 = vmatpush1.msra.mxu0 0.0
  %2693 = vmatprep.subr.mxu0 0.0
  %2694 = vmatpush1.msra.mxu0 0.0
  %2695 = vmatprep.subr.mxu0 0.0
  %2696 = vmatpush1.msra.mxu0 0.0
  %2697 = vmatprep.subr.mxu0 0.0
  %2698 = vmatpush1.msra.mxu0 0.0
  %2699 = vmatprep.mubr.f32.mxu0 0.0
  %2700 = vmatmul.mubr.f32.gmra.mrb[0].mxu0 %v2588
  %v2701 = vpop.f32.mrb[0].mxu0
  %v2702 = vadd.f32 %v2585, %v2701
  %v2703 = vpop.f32.mrb[0].mxu0
  %2704 = vmatprep.mubr.f32.mxu0 0.0
  %2705 = vmatmul.mubr.f32.gmra.mrb[0].mxu0 %v2591
  %v2706 = vpop.f32.mrb[0].mxu0
  %v2707 = vadd.f32 %v2585, %v2706
  %v2708 = vpop.f32.mrb[0].mxu0
  %2709 = vmatprep.mubr.f32.mxu0 0.0
  %2710 = vmatmul.mubr.f32.gmra.mrb[0].mxu0 %v2594
  %v2711 = vpop.f32.mrb[0].mxu0
  %v2712 = vadd.f32 %v2585, %v2711
  %v2713 = vpop.f32.mrb[0].mxu0
  %2714 = vmatprep.mubr.f32.mxu0 0.0
  %2715 = vmatmul.mubr.f32.gmra.mrb[0].mxu0 %v2597
  %v2716 = vpop.f32.mrb[0].mxu0
  %v2717 = vadd.f32 %v2585, %v2716
  %v2718 = vpop.f32.mrb[0].mxu0
  %2719 = vmatprep.mubr.f32.mxu0 0.0
  %2720 = vmatmul.mubr.f32.gmra.mrb[0].mxu0 %v2600
  %v2721 = vpop.f32.mrb[0].mxu0
  %v2722 = vadd.f32 %v2585, %v2721
  %v2723 = vpop.f32.mrb[0].mxu0
  %2724 = vmatprep.mubr.f32.mxu0 0.0
  %2725 = vmatmul.mubr.f32.gmra.mrb[0].mxu0 %v2603
  %v2726 = vpop.f32.mrb[0].mxu0
  %v2727 = vadd.f32 %v2585, %v2726
  %v2728 = vpop.f32.mrb[0].mxu0
  %2729 = vmatprep.mubr.f32.mxu0 0.0
  %2730 = vmatmul.mubr.f32.gmra.mrb[0].mxu0 %v2606
  %v2731 = vpop.f32.mrb[0].mxu0
  %v2732 = vadd.f32 %v2585, %v2731
  %v2733 = vpop.f32.mrb[0].mxu0
  %2734 = vmatprep.mubr.f32.mxu0 0.0
  %2735 = vmatmul.mubr.f32.gmra.mrb[0].mxu0 %v2609
  %v2736 = vpop.f32.mrb[0].mxu0
  %v2737 = vadd.f32 %v2585, %v2736
  %v2738 = vpop.f32.mrb[0].mxu0
  %2739 = vmatprep.mubr.f32.mxu0 0.0
  %2740 = vmatmul.mubr.f32.gmra.mrb[0].mxu0 %v2612
  %v2741 = vpop.f32.mrb[0].mxu0
  %v2742 = vadd.f32 %v2585, %v2741
  %v2743 = vpop.f32.mrb[0].mxu0
  %2744 = vmatprep.mubr.f32.mxu0 0.0
  %2745 = vmatmul.mubr.f32.gmra.mrb[0].mxu0 %v2615
  %v2746 = vpop.f32.mrb[0].mxu0
  %v2747 = vadd.f32 %v2585, %v2746
  %v2748 = vpop.f32.mrb[0].mxu0
  %2749 = vmatprep.mubr.f32.mxu0 0.0
  %2750 = vmatmul.mubr.f32.gmra.mrb[0].mxu0 %v2618
  %v2751 = vpop.f32.mrb[0].mxu0
  %v2752 = vadd.f32 %v2585, %v2751
  %v2753 = vpop.f32.mrb[0].mxu0
  %2754 = vmatprep.mubr.f32.mxu0 0.0
  %2755 = vmatmul.mubr.f32.gmra.mrb[0].mxu0 %v2621
  %v2756 = vpop.f32.mrb[0].mxu0
  %v2757 = vadd.f32 %v2585, %v2756
  %v2758 = vpop.f32.mrb[0].mxu0
  %2759 = vmatprep.mubr.f32.mxu0 0.0
  %2760 = vmatmul.mubr.f32.gmra.mrb[0].mxu0 %v2624
  %v2761 = vpop.f32.mrb[0].mxu0
  %v2762 = vadd.f32 %v2585, %v2761
  %v2763 = vpop.f32.mrb[0].mxu0
  %2764 = vmatprep.mubr.f32.mxu0 0.0
  %2765 = vmatmul.mubr.f32.gmra.mrb[0].mxu0 %v2627
  %v2766 = vpop.f32.mrb[0].mxu0
  %v2767 = vadd.f32 %v2585, %v2766
  %v2768 = vpop.f32.mrb[0].mxu0
  %2769 = vmatprep.mubr.f32.mxu0 0.0
  %2770 = vmatmul.mubr.f32.gmra.mrb[0].mxu0 %v2630
  %v2771 = vpop.f32.mrb[0].mxu0
  %v2772 = vadd.f32 %v2585, %v2771
  %v2773 = vpop.f32.mrb[0].mxu0
  %2774 = vmatprep.mubr.f32.mxu0 0.0
  %2775 = vmatmul.mubr.f32.gmra.mrb[0].mxu0 %v2633
  %v2776 = vpop.f32.mrb[0].mxu0
  %v2777 = vadd.f32 %v2585, %v2776
  %v2778 = vpop.f32.mrb[0].mxu0
  %2779 = vdwg.mxu0
  %v2780 = vadd.f32 %v2702, %v50
  %v2781 = vadd.f32 %v2707, %v51
  %v2782 = vadd.f32 %v2712, %v52
  %v2783 = vadd.f32 %v2717, %v53
  %v2784 = vadd.f32 %v2722, %v54
  %v2785 = vadd.f32 %v2727, %v55
  %v2786 = vadd.f32 %v2732, %v56
  %v2787 = vadd.f32 %v2737, %v57
  %v2788 = vadd.f32 %v2742, %v58
  %v2789 = vadd.f32 %v2747, %v59
  %v2790 = vadd.f32 %v2752, %v60
  %v2791 = vadd.f32 %v2757, %v61
  %v2792 = vadd.f32 %v2762, %v62
  %v2793 = vadd.f32 %v2767, %v63
  %v2794 = vadd.f32 %v2772, %v64
  %v2795 = vadd.f32 %v2777, %v65
  %2796 = vst.msk [vmem:[%s15] sm:$0xff] %vm1283, %v2780
  %2797 = vst.msk [vmem:[%s15 + $0x8] sm:$0xff] %vm1283, %v2781
  %2798 = vst.msk [vmem:[%s15 + $0x10] sm:$0xff] %vm1283, %v2782
  %2799 = vst.msk [vmem:[%s15 + $0x18] sm:$0xff] %vm1283, %v2783
  %2800 = vst.msk [vmem:[%s15 + $0x20] sm:$0xff] %vm1283, %v2784
  %2801 = vst.msk [vmem:[%s15 + $0x28] sm:$0xff] %vm1283, %v2785
  %2802 = vst.msk [vmem:[%s15 + $0x30] sm:$0xff] %vm1283, %v2786
  %2803 = vst.msk [vmem:[%s15 + $0x38] sm:$0xff] %vm1283, %v2787
  %2804 = vst.msk [vmem:[%s15 + $0x40] sm:$0xff] %vm1283, %v2788
  %2805 = vst.msk [vmem:[%s15 + $0x48] sm:$0xff] %vm1283, %v2789
  %2806 = vst.msk [vmem:[%s15 + $0x50] sm:$0xff] %vm1283, %v2790
  %2807 = vst.msk [vmem:[%s15 + $0x58] sm:$0xff] %vm1283, %v2791
  %2808 = vst.msk [vmem:[%s15 + $0x60] sm:$0xff] %vm1283, %v2792
  %2809 = vst.msk [vmem:[%s15 + $0x68] sm:$0xff] %vm1283, %v2793
  %2810 = vst.msk [vmem:[%s15 + $0x70] sm:$0xff] %vm1283, %v2794
  %2811 = vst.msk [vmem:[%s15 + $0x78] sm:$0xff] %vm1283, %v2795
  // Predicated region
  $region62: #{diffusion_net_block.1} parent=0 // pred_check
    _
  $region63: #{diffusion_net_block.1} parent=0 // pred_check_branch
    %2813 = sbr.rel (0) target = $region65
  $region64: #{diffusion_net_block.1} parent=0 // pred_region
    _
  $region65: #{diffusion_net_block.1} parent=0 // pred_fallthru
    _
  // Predicated region
  $region66: #{diffusion_net_block.1} parent=0 // pred_check
    _
  $region67: #{diffusion_net_block.1} parent=0 // pred_check_branch
    %2815 = sbr.rel (0) target = $region69
  $region68: #{diffusion_net_block.1} parent=0 // pred_region
    _
  $region69: #{diffusion_net_block.1} parent=0 // pred_fallthru
    _

</llo_original>
